<compile_context>
chip_gen: v7x
topology: tpu7x:2x2x1
jax: 0.10.0
libtpu: 0.0.40
codegen_flags: <defaults>
</compile_context>

<pallas_src>
import math
from functools import partial

import jax
import jax.numpy as jnp
import numpy as np
from jax import lax
from jax.experimental import pallas as pl
from jax.experimental.pallas import tpu as pltpu


# ----------------------------- tiling helpers -----------------------------

def _pick_tile(M, target):
    """Largest multiple-of-8 divisor of M that is <= target (else M itself: full block)."""
    if M <= target:
        return M
    t = target - (target % 8)
    for cand in range(t, 7, -8):
        if M % cand == 0:
            return cand
    return M


# ----------------------------- fused KV kernels -----------------------------

def _linear_kernel(x_ref, w_ref, b_ref, o_ref):
    # bf16 MXU operands (weights pre-cast in wrapper), f32 accumulation, fused bias.
    acc = jnp.dot(x_ref[0].astype(jnp.bfloat16), w_ref[...],
                  preferred_element_type=jnp.float32)
    o_ref[0] = (acc + b_ref[...]).astype(o_ref.dtype)


def fused_kv_linear(x3, w_kv, b_kv, *, block_m=256):
    """x3: (B, L, C) @ w_kv(bf16): (C, N) + b_kv: (N,) -> (B, L, N) bf16."""
    B, L, C = x3.shape
    N = w_kv.shape[1]
    tm = _pick_tile(L, block_m)
    nm = L // tm
    return pl.pallas_call(
        _linear_kernel,
        out_shape=jax.ShapeDtypeStruct((B, L, N), jnp.bfloat16),
        grid=(B, nm),
        in_specs=[
            pl.BlockSpec((1, tm, C), lambda b, i: (b, i, 0)),
            pl.BlockSpec((C, N), lambda b, i: (0, 0)),
            pl.BlockSpec((1, N), lambda b, i: (0, 0)),
        ],
        out_specs=pl.BlockSpec((1, tm, N), lambda b, i: (b, i, 0)),
        compiler_params=pltpu.CompilerParams(
            dimension_semantics=("parallel", "parallel")),
    )(x3, w_kv, b_kv.reshape(1, N))


def _sr_ln_kv_kernel(p_ref, wsr_ref, bsr_ref, g_ref, bn_ref, wkv_ref, bkv_ref, o_ref, *, eps):
    # spatial-reduction conv expressed as patch matmul + bias (weights pre-cast bf16)
    x = jnp.dot(p_ref[0].astype(jnp.bfloat16), wsr_ref[...],
                preferred_element_type=jnp.float32)
    x = x + bsr_ref[...]
    # fused LayerNorm (f32)
    mean = jnp.mean(x, axis=-1, keepdims=True)
    var = jnp.mean((x - mean) ** 2, axis=-1, keepdims=True)
    xn = (x - mean) * lax.rsqrt(var + eps)
    xn = xn * g_ref[...] + bn_ref[...]
    # fused K | V_tilde projection (Wp already folded into the V columns by the wrapper)
    kv = jnp.dot(xn.astype(jnp.bfloat16), wkv_ref[...],
                 preferred_element_type=jnp.float32)
    o_ref[0] = (kv + bkv_ref[...]).astype(o_ref.dtype)


def sr_ln_kv(patches, w_sr, b_sr, g, bn, w_kv, b_kv, *, eps=1e-5, out_dtype=jnp.bfloat16):
    """patches: (B, Lk, R*R*C) -> conv-as-matmul -> LN -> K|V_tilde proj -> (B, Lk, N)."""
    B, Lk, Kp = patches.shape
    C = w_sr.shape[1]
    N = w_kv.shape[1]
    return pl.pallas_call(
        partial(_sr_ln_kv_kernel, eps=eps),
        out_shape=jax.ShapeDtypeStruct((B, Lk, N), out_dtype),
        grid=(B,),
        in_specs=[
            pl.BlockSpec((1, Lk, Kp), lambda b: (b, 0, 0)),
            pl.BlockSpec((Kp, C), lambda b: (0, 0)),
            pl.BlockSpec((1, C), lambda b: (0, 0)),
            pl.BlockSpec((1, C), lambda b: (0, 0)),
            pl.BlockSpec((1, C), lambda b: (0, 0)),
            pl.BlockSpec((C, N), lambda b: (0, 0)),
            pl.BlockSpec((1, N), lambda b: (0, 0)),
        ],
        out_specs=pl.BlockSpec((1, Lk, N), lambda b: (b, 0, 0)),
        compiler_params=pltpu.CompilerParams(dimension_semantics=("parallel",)),
    )(patches, w_sr, b_sr.reshape(1, C), g.reshape(1, C), bn.reshape(1, C),
      w_kv, b_kv.reshape(1, N))


# ----------------------------- attention kernels -----------------------------
# kv layout per row: [ K (C columns) | V_eff (n_heads * cv columns) ]
#   fold=True  : cv = C, V_eff_h = V_h @ Wp_h  -> out = sum_h softmax_h @ V_eff_h + bp
#   fold=False : cv = f, V_eff = V             -> out = concat_h(softmax_h @ V_h) @ Wp + bp

def _attn_onepass_kernel(x_ref, wq_ref, bq_ref, kv_ref, *rest, n_heads, f, scale, fold):
    """Single kv tile covers all of Lk: plain softmax, all state in vregs (no scratch)."""
    if fold:
        bp_ref, o_ref = rest
        wp_ref = None
    else:
        wp_ref, bp_ref, o_ref = rest
    C = n_heads * f
    cv = C if fold else f

    # fused Q projection; 1/sqrt(f) folded into q
    q = jnp.dot(x_ref[0].astype(jnp.bfloat16), wq_ref[...],
                preferred_element_type=jnp.float32)
    qb = ((q + bq_ref[...]) * scale).astype(jnp.bfloat16)
    kv = kv_ref[0]

    acc = None
    parts = []
    for h in range(n_heads):
        s = lax.dot_general(qb[:, h * f:(h + 1) * f], kv[:, h * f:(h + 1) * f],
                            (((1,), (1,)), ((), ())),
                            preferred_element_type=jnp.float32)       # (tq, Lk)
        s = s - jnp.max(s, axis=-1, keepdims=True)
        p = jnp.exp(s)
        inv_l = pl.reciprocal(jnp.sum(p, axis=-1, keepdims=True), approx=True)
        pv = jnp.dot(p.astype(jnp.bfloat16), kv[:, C + h * cv: C + (h + 1) * cv],
                     preferred_element_type=jnp.float32)
        contrib = pv * inv_l
        if fold:
            acc = contrib if acc is None else acc + contrib
        else:
            parts.append(contrib)

    if fold:
        o_ref[0] = (acc + bp_ref[...]).astype(o_ref.dtype)
    else:
        y = jnp.concatenate(parts, axis=-1).astype(jnp.bfloat16)
        out = jnp.dot(y, wp_ref[...], preferred_element_type=jnp.float32)
        o_ref[0] = (out + bp_ref[...]).astype(o_ref.dtype)


def _attn_flash_kernel(x_ref, wq_ref, bq_ref, kv_ref, *rest, n_heads, f, scale, fold):
    """Multiple kv tiles: online softmax with running (m, l, acc) in VMEM scratch."""
    if fold:
        bp_ref, o_ref, q_s, m_s, l_s, acc_s = rest
        wp_ref = None
    else:
        wp_ref, bp_ref, o_ref, q_s, m_s, l_s, acc_s = rest
    C = n_heads * f
    cv = C if fold else f
    ki = pl.program_id(2)
    nk = pl.num_programs(2)

    @pl.when(ki == 0)
    def _init():
        q = jnp.dot(x_ref[0].astype(jnp.bfloat16), wq_ref[...],
                    preferred_element_type=jnp.float32)
        q_s[...] = ((q + bq_ref[...]) * scale).astype(jnp.bfloat16)
        m_s[...] = jnp.full(m_s.shape, -jnp.inf, dtype=m_s.dtype)
        l_s[...] = jnp.zeros(l_s.shape, dtype=l_s.dtype)
        acc_s[...] = jnp.zeros(acc_s.shape, dtype=acc_s.dtype)

    kv = kv_ref[0]                                                   # (tk, C + n_heads*cv)
    for h in range(n_heads):
        q_h = q_s[:, h * f:(h + 1) * f]
        k_h = kv[:, h * f:(h + 1) * f]
        v_h = kv[:, C + h * cv: C + (h + 1) * cv]
        s = lax.dot_general(q_h, k_h, (((1,), (1,)), ((), ())),
                            preferred_element_type=jnp.float32)      # (tq, tk) -> vregs
        m_prev = m_s[:, h:h + 1]
        m_new = jnp.maximum(m_prev, jnp.max(s, axis=-1, keepdims=True))
        alpha = jnp.exp(m_prev - m_new)
        p = jnp.exp(s - m_new)
        l_s[:, h:h + 1] = alpha * l_s[:, h:h + 1] + jnp.sum(p, axis=-1, keepdims=True)
        m_s[:, h:h + 1] = m_new
        pv = jnp.dot(p.astype(jnp.bfloat16), v_h, preferred_element_type=jnp.float32)
        acc_s[:, h * cv:(h + 1) * cv] = alpha * acc_s[:, h * cv:(h + 1) * cv] + pv

    @pl.when(ki == nk - 1)
    def _finalize():
        if fold:
            out = acc_s[:, 0:cv] * pl.reciprocal(l_s[:, 0:1], approx=True)
            for h in range(1, n_heads):
                out = out + acc_s[:, h * cv:(h + 1) * cv] * pl.reciprocal(
                    l_s[:, h:h + 1], approx=True)
            o_ref[0] = (out + bp_ref[...]).astype(o_ref.dtype)
        else:
            parts = [acc_s[:, h * cv:(h + 1) * cv] * pl.reciprocal(
                         l_s[:, h:h + 1], approx=True) for h in range(n_heads)]
            y = jnp.concatenate(parts, axis=-1).astype(jnp.bfloat16)
            out = jnp.dot(y, wp_ref[...], preferred_element_type=jnp.float32)
            o_ref[0] = (out + bp_ref[...]).astype(o_ref.dtype)


def attention(x3, wq_bf16, bq, kv3, wp_bf16, bp, *, n_heads, fold,
              block_q=128, block_k=512):
    """Fused Q-projection + per-head attention (+ output projection when not folded)."""
    B, L, C = x3.shape
    _, Lk, Ckv = kv3.shape
    f = C // n_heads
    cv = C if fold else f
    assert Ckv == C + n_heads * cv
    scale = 1.0 / math.sqrt(f)
    tq = _pick_tile(L, block_q)
    nq = L // tq
    tk = _pick_tile(Lk, block_k)     # full-extent block when Lk has no mult-of-8 divisor
    nk = Lk // tk

    qmap = lambda b, qi, ki: (b, qi, 0)
    wmap = lambda b, qi, ki: (0, 0)
    kvmap = lambda b, qi, ki: (b, ki, 0)

    in_specs = [
        pl.BlockSpec((1, tq, C), qmap),
        pl.BlockSpec((C, C), wmap),
        pl.BlockSpec((1, C), wmap),
        pl.BlockSpec((1, tk, Ckv), kvmap),
    ]
    args = [x3, wq_bf16, bq.reshape(1, C), kv3]
    if not fold:
        in_specs.append(pl.BlockSpec((C, C), wmap))
        args.append(wp_bf16)
    in_specs.append(pl.BlockSpec((1, C), wmap))
    args.append(bp.reshape(1, C))

    if nk == 1:
        kern = partial(_attn_onepass_kernel, n_heads=n_heads, f=f, scale=scale, fold=fold)
        scratch = []
    else:
        kern = partial(_attn_flash_kernel, n_heads=n_heads, f=f, scale=scale, fold=fold)
        scratch = [pltpu.VMEM((tq, C), jnp.bfloat16),          # q (projected once per tile)
                   pltpu.VMEM((tq, n_heads), jnp.float32),     # running max
                   pltpu.VMEM((tq, n_heads), jnp.float32),     # running sum
                   pltpu.VMEM((tq, n_heads * cv), jnp.float32)]  # running PV accumulator

    return pl.pallas_call(
        kern,
        out_shape=jax.ShapeDtypeStruct((B, L, C), x3.dtype),
        grid=(B, nq, nk),
        in_specs=in_specs,
        out_specs=pl.BlockSpec((1, tq, C), qmap),
        scratch_shapes=scratch,
        compiler_params=pltpu.CompilerParams(
            dimension_semantics=("parallel", "parallel", "arbitrary"),
            vmem_limit_bytes=48 * 1024 * 1024),
    )(*args)


# ----------------------------- model (glue + kernels) -----------------------------

def init_params(key, C, n_heads, R):
    ks = jax.random.split(key, 8)

    def dense(k, fan_in, fan_out):
        kw, kb = jax.random.split(k)
        w = jax.random.normal(kw, (fan_in, fan_out), jnp.float32) / math.sqrt(fan_in)
        b = 0.1 * jax.random.normal(kb, (fan_out,), jnp.float32)
        return w, b

    p = {}
    p["wq"], p["bq"] = dense(ks[0], C, C)
    p["wk"], p["bk"] = dense(ks[1], C, C)
    p["wv"], p["bv"] = dense(ks[2], C, C)
    p["wp"], p["bp"] = dense(ks[3], C, C)
    if R > 1:
        kw, kb = jax.random.split(ks[4])
        p["w_sr_conv"] = jax.random.normal(kw, (C, C, R, R), jnp.float32) / math.sqrt(C * R * R)
        p["b_sr"] = 0.1 * jax.random.normal(kb, (C,), jnp.float32)
        kg, kb2 = jax.random.split(ks[5])
        p["srn_g"] = 1.0 + 0.1 * jax.random.normal(kg, (C,), jnp.float32)
        p["srn_b"] = 0.1 * jax.random.normal(kb2, (C,), jnp.float32)
    return p


def multi_head_attention(params, x, H, W, n_heads, R, *, block_q=128, block_k=512):
    B, L, C = x.shape
    assert L == H * W and C % n_heads == 0
    f = C // n_heads

    # weights cast to bf16 ONCE here (not per grid step inside the kernels)
    wq = params["wq"].astype(jnp.bfloat16)
    wp = params["wp"].astype(jnp.bfloat16)

    if R > 1:
        assert H % R == 0 and W % R == 0
        Hr, Wr = H // R, W // R
        Lk = Hr * Wr
        fold = True
        # Fold the output projection into the V projection per head:
        #   V_tilde_h = x_n @ (Wv[:, h] @ Wp[h, :]) + (bv_h @ Wp[h, :])
        # -> attention output = sum_h softmax_h @ V_tilde_h + bp   (exact rewrite)
        wv, bv, wpf = params["wv"], params["bv"], params["wp"]
        wvp, bvp = [], []
        for h in range(n_heads):
            sl = slice(h * f, (h + 1) * f)
            wvp.append(wv[:, sl] @ wpf[sl, :])
            bvp.append(bv[sl] @ wpf[sl, :])
        w_kvt = jnp.concatenate([params["wk"]] + wvp, axis=1).astype(jnp.bfloat16)
        b_kvt = jnp.concatenate([params["bk"]] + bvp, axis=0)

        # Spatial-reduction conv (kernel=R, stride=R) as patch matmul: the patch
        # extraction is layout glue in JAX; matmul + bias + LN + K|V_tilde projection
        # happen in ONE Pallas kernel.
        # TODO(synk): fold the RxR patch gather into the SR kernel (strided in-kernel
        # loads) to remove this extra mem-bound HBM pass over x.
        patches = x.reshape(B, Hr, R, Wr, R, C).transpose(0, 1, 3, 2, 4, 5)
        patches = patches.reshape(B, Lk, R * R * C)               # per-patch (kr, kc, c)
        w_sr = jnp.transpose(params["w_sr_conv"], (2, 3, 1, 0)).reshape(R * R * C, C)
        kv3 = sr_ln_kv(patches, w_sr.astype(jnp.bfloat16), params["b_sr"],
                       params["srn_g"], params["srn_b"], w_kvt, b_kvt)
    else:
        fold = False
        # no spatial reduction: Lk == L, folding Wp would multiply FLOPs -> keep plain K|V
        w_kv = jnp.concatenate([params["wk"], params["wv"]], axis=1).astype(jnp.bfloat16)
        b_kv = jnp.concatenate([params["bk"], params["bv"]], axis=0)
        kv3 = fused_kv_linear(x, w_kv, b_kv)

    return attention(x, wq, params["bq"], kv3, wp, params["bp"],
                     n_heads=n_heads, fold=fold, block_q=block_q, block_k=block_k)


# ----------------------------- pure-JAX reference -----------------------------

def reference(params, x, H, W, n_heads, R):
    B, L, C = x.shape
    f = C // n_heads
    eps = 1e-5

    q = (x @ params["wq"] + params["bq"]).reshape(B, L, n_heads, f).transpose(0, 2, 1, 3)
    if R > 1:
        xr = x.reshape(B, H, W, C).transpose(0, 3, 1, 2)           # NCHW like PyTorch
        xr = lax.conv_general_dilated(xr, params["w_sr_conv"], window_strides=(R, R),
                                      padding="VALID",
                                      dimension_numbers=("NCHW", "OIHW", "NCHW"))
        xr = xr + params["b_sr"][None, :, None, None]
        Lk = (H // R) * (W // R)
        xr = xr.reshape(B, C, Lk).transpose(0, 2, 1)
        m = jnp.mean(xr, axis=-1, keepdims=True)
        v = jnp.mean((xr - m) ** 2, axis=-1, keepdims=True)
        kv_in = (xr - m) / jnp.sqrt(v + eps) * params["srn_g"] + params["srn_b"]
    else:
        Lk = L
        kv_in = x
    k = (kv_in @ params["wk"] + params["bk"]).reshape(B, Lk, n_heads, f).transpose(0, 2, 1, 3)
    v_ = (kv_in @ params["wv"] + params["bv"]).reshape(B, Lk, n_heads, f).transpose(0, 2, 1, 3)
    scores = (q @ k.transpose(0, 1, 3, 2)) / math.sqrt(f)
    att = jax.nn.softmax(scores, axis=-1)
    y = (att @ v_).transpose(0, 2, 1, 3).reshape(B, L, C)
    return y @ params["wp"] + params["bp"]


# ----------------------------- main -----------------------------

if __name__ == "__main__":
    B, C, n_heads = 2, 32, 4

    key = jax.random.PRNGKey(0)
    kx, kx2, kp1, kp2, kp3 = jax.random.split(key, 5)

    # 1) R=2, small image: SR conv + LN + Wp-folded KV; single-pass (scratch-free) attention
    H = W = 8
    L = H * W
    x = jax.random.normal(kx, (B, L, C), jnp.float32)
    params = init_params(kp1, C, n_heads, 2)
    fwd = jax.jit(partial(multi_head_attention, H=H, W=W, n_heads=n_heads, R=2, block_q=32))
    out = jax.block_until_ready(fwd(params, x))
    assert out.shape == (B, L, C)
    ref = reference(params, x, H, W, n_heads, 2)
    np.testing.assert_allclose(np.asarray(out), np.asarray(ref), atol=5e-2, rtol=5e-2)

    # 2) R=1: plain K|V; flash (online-softmax) attention with nq=2, nk=2 kv tiles
    params1 = init_params(kp2, C, n_heads, 1)
    fwd1 = jax.jit(partial(multi_head_attention, H=H, W=W, n_heads=n_heads, R=1,
                           block_q=32, block_k=32))
    out1 = jax.block_until_ready(fwd1(params1, x))
    ref1 = reference(params1, x, H, W, n_heads, 1)
    np.testing.assert_allclose(np.asarray(out1), np.asarray(ref1), atol=5e-2, rtol=5e-2)

    # 3) R=2, larger image: Wp-folded KV + flash attention (fold path with kv tiling)
    H2 = W2 = 16
    L2 = H2 * W2
    x2 = jax.random.normal(kx2, (B, L2, C), jnp.float32)
    params3 = init_params(kp3, C, n_heads, 2)
    fwd3 = jax.jit(partial(multi_head_attention, H=H2, W=W2, n_heads=n_heads, R=2,
                           block_q=32, block_k=32))
    out3 = jax.block_until_ready(fwd3(params3, x2))
    ref3 = reference(params3, x2, H2, W2, n_heads, 2)
    np.testing.assert_allclose(np.asarray(out3), np.asarray(ref3), atol=5e-2, rtol=5e-2)

    print("KERNEL_OK")
</pallas_src>

<mosaic_0001>
module attributes {stable_mosaic.version = 11 : i64} {
  func.func @_sr_ln_kv_kernel(%arg0: i32, %arg1: memref<1x16x128xf32, #tpu.memory_space<vmem>>, %arg2: memref<128x32xbf16, #tpu.memory_space<vmem>>, %arg3: memref<1x32xf32, #tpu.memory_space<vmem>>, %arg4: memref<1x32xf32, #tpu.memory_space<vmem>>, %arg5: memref<1x32xf32, #tpu.memory_space<vmem>>, %arg6: memref<32x160xbf16, #tpu.memory_space<vmem>>, %arg7: memref<1x160xf32, #tpu.memory_space<vmem>>, %arg8: memref<1x16x160xbf16, #tpu.memory_space<vmem>>) attributes {dimension_semantics = [#tpu.dimension_semantics<parallel>], iteration_bounds = array<i64: 2>, scalar_prefetch = 0 : i64, scratch_operands = 0 : i64, tpu.core_type = #tpu.core_type<tc>, window_params = [{transform_indices = @transform_0, window_bounds = array<i64: 1, 16, 128>}, {pipeline_mode = #tpu.pipeline_mode<synchronous>, transform_indices = @transform_1, window_bounds = array<i64: 128, 32>}, {pipeline_mode = #tpu.pipeline_mode<synchronous>, transform_indices = @transform_2, window_bounds = array<i64: 1, 32>}, {pipeline_mode = #tpu.pipeline_mode<synchronous>, transform_indices = @transform_3, window_bounds = array<i64: 1, 32>}, {pipeline_mode = #tpu.pipeline_mode<synchronous>, transform_indices = @transform_4, window_bounds = array<i64: 1, 32>}, {pipeline_mode = #tpu.pipeline_mode<synchronous>, transform_indices = @transform_5, window_bounds = array<i64: 32, 160>}, {pipeline_mode = #tpu.pipeline_mode<synchronous>, transform_indices = @transform_6, window_bounds = array<i64: 1, 160>}, {transform_indices = @transform_7, window_bounds = array<i64: 1, 16, 160>}]} {
    %c0 = arith.constant 0 : index
    %c0_0 = arith.constant 0 : index
    %c0_1 = arith.constant 0 : index
    %0 = vector.load %arg1[%c0, %c0_0, %c0_1] : memref<1x16x128xf32, #tpu.memory_space<vmem>>, vector<1x16x128xf32>
    %1 = vector.shape_cast %0 : vector<1x16x128xf32> to vector<16x128xf32>
    %2 = arith.truncf %1 : vector<16x128xf32> to vector<16x128xbf16>
    %c0_2 = arith.constant 0 : index
    %c0_3 = arith.constant 0 : index
    %3 = vector.load %arg2[%c0_2, %c0_3] : memref<128x32xbf16, #tpu.memory_space<vmem>>, vector<128x32xbf16>
    %cst = arith.constant dense<0.000000e+00> : vector<16x32xf32>
    %4 = tpu.matmul %2, %3, %cst {dimension_numbers = #tpu.dot_dimension_numbers<[1], [0], [0], [1], [0, 0, 1, 1], [], []>} : vector<16x128xbf16>, vector<128x32xbf16>, vector<16x32xf32> -> vector<16x32xf32>
    %c0_4 = arith.constant 0 : index
    %c0_5 = arith.constant 0 : index
    %5 = vector.load %arg3[%c0_4, %c0_5] : memref<1x32xf32, #tpu.memory_space<vmem>>, vector<1x32xf32>
    %6 = vector.broadcast %5 : vector<1x32xf32> to vector<16x32xf32>
    %7 = arith.addf %4, %6 : vector<16x32xf32>
    %cst_6 = arith.constant dense<0.000000e+00> : vector<16xf32>
    %8 = vector.multi_reduction <add>, %7, %cst_6 [1] : vector<16x32xf32> to vector<16xf32>
    %9 = vector.shape_cast %8 : vector<16xf32> to vector<16x1xf32>
    %cst_7 = arith.constant 3.200000e+01 : f32
    %10 = vector.broadcast %cst_7 : f32 to vector<16x1xf32>
    %11 = arith.divf %9, %10 : vector<16x1xf32>
    %12 = vector.broadcast %11 : vector<16x1xf32> to vector<16x32xf32>
    %13 = arith.subf %7, %12 : vector<16x32xf32>
    %14 = arith.mulf %13, %13 : vector<16x32xf32>
    %cst_8 = arith.constant dense<0.000000e+00> : vector<16xf32>
    %15 = vector.multi_reduction <add>, %14, %cst_8 [1] : vector<16x32xf32> to vector<16xf32>
    %16 = vector.shape_cast %15 : vector<16xf32> to vector<16x1xf32>
    %cst_9 = arith.constant 3.200000e+01 : f32
    %17 = vector.broadcast %cst_9 : f32 to vector<16x1xf32>
    %18 = arith.divf %16, %17 : vector<16x1xf32>
    %19 = vector.broadcast %11 : vector<16x1xf32> to vector<16x32xf32>
    %20 = arith.subf %7, %19 : vector<16x32xf32>
    %cst_10 = arith.constant 9.99999974E-6 : f32
    %21 = vector.broadcast %cst_10 : f32 to vector<16x1xf32>
    %22 = arith.addf %18, %21 : vector<16x1xf32>
    %23 = math.rsqrt %22 : vector<16x1xf32>
    %24 = vector.broadcast %23 : vector<16x1xf32> to vector<16x32xf32>
    %25 = arith.mulf %20, %24 : vector<16x32xf32>
    %c0_11 = arith.constant 0 : index
    %c0_12 = arith.constant 0 : index
    %26 = vector.load %arg4[%c0_11, %c0_12] : memref<1x32xf32, #tpu.memory_space<vmem>>, vector<1x32xf32>
    %27 = vector.broadcast %26 : vector<1x32xf32> to vector<16x32xf32>
    %28 = arith.mulf %25, %27 : vector<16x32xf32>
    %c0_13 = arith.constant 0 : index
    %c0_14 = arith.constant 0 : index
    %29 = vector.load %arg5[%c0_13, %c0_14] : memref<1x32xf32, #tpu.memory_space<vmem>>, vector<1x32xf32>
    %30 = vector.broadcast %29 : vector<1x32xf32> to vector<16x32xf32>
    %31 = arith.addf %28, %30 : vector<16x32xf32>
    %32 = arith.truncf %31 : vector<16x32xf32> to vector<16x32xbf16>
    %c0_15 = arith.constant 0 : index
    %c0_16 = arith.constant 0 : index
    %33 = vector.load %arg6[%c0_15, %c0_16] : memref<32x160xbf16, #tpu.memory_space<vmem>>, vector<32x160xbf16>
    %cst_17 = arith.constant dense<0.000000e+00> : vector<16x160xf32>
    %34 = tpu.matmul %32, %33, %cst_17 {dimension_numbers = #tpu.dot_dimension_numbers<[1], [0], [0], [1], [0, 0, 1, 1], [], []>} : vector<16x32xbf16>, vector<32x160xbf16>, vector<16x160xf32> -> vector<16x160xf32>
    %c0_18 = arith.constant 0 : index
    %c0_19 = arith.constant 0 : index
    %35 = vector.load %arg7[%c0_18, %c0_19] : memref<1x160xf32, #tpu.memory_space<vmem>>, vector<1x160xf32>
    %36 = vector.broadcast %35 : vector<1x160xf32> to vector<16x160xf32>
    %37 = arith.addf %34, %36 : vector<16x160xf32>
    %38 = arith.truncf %37 : vector<16x160xf32> to vector<16x160xbf16>
    %c0_20 = arith.constant 0 : index
    %c0_21 = arith.constant 0 : index
    %c0_22 = arith.constant 0 : index
    %39 = vector.load %arg8[%c0_20, %c0_21, %c0_22] : memref<1x16x160xbf16, #tpu.memory_space<vmem>>, vector<1x16x160xbf16>
    %40 = vector.shape_cast %39 : vector<1x16x160xbf16> to vector<16x160xbf16>
    %41 = vector.shape_cast %38 : vector<16x160xbf16> to vector<1x16x160xbf16>
    tpu.vector_store %arg8[%c0_20, %c0_21, %c0_22], %41 {strides = array<i32>} : memref<1x16x160xbf16, #tpu.memory_space<vmem>>, vector<1x16x160xbf16>,
    return
  }
  func.func @transform_0(%arg0: i32) -> (i32, i32, i32) {
    %c0_i32 = arith.constant 0 : i32
    %c0_i32_0 = arith.constant 0 : i32
    %c0_i32_1 = arith.constant 0 : i32
    return %arg0, %c0_i32, %c0_i32_0 : i32, i32, i32
  }
  func.func @transform_1(%arg0: i32) -> (i32, i32) {
    %c0_i32 = arith.constant 0 : i32
    %c0_i32_0 = arith.constant 0 : i32
    %c0_i32_1 = arith.constant 0 : i32
    return %c0_i32, %c0_i32_0 : i32, i32
  }
  func.func @transform_2(%arg0: i32) -> (i32, i32) {
    %c0_i32 = arith.constant 0 : i32
    %c0_i32_0 = arith.constant 0 : i32
    %c0_i32_1 = arith.constant 0 : i32
    return %c0_i32, %c0_i32_0 : i32, i32
  }
  func.func @transform_3(%arg0: i32) -> (i32, i32) {
    %c0_i32 = arith.constant 0 : i32
    %c0_i32_0 = arith.constant 0 : i32
    %c0_i32_1 = arith.constant 0 : i32
    return %c0_i32, %c0_i32_0 : i32, i32
  }
  func.func @transform_4(%arg0: i32) -> (i32, i32) {
    %c0_i32 = arith.constant 0 : i32
    %c0_i32_0 = arith.constant 0 : i32
    %c0_i32_1 = arith.constant 0 : i32
    return %c0_i32, %c0_i32_0 : i32, i32
  }
  func.func @transform_5(%arg0: i32) -> (i32, i32) {
    %c0_i32 = arith.constant 0 : i32
    %c0_i32_0 = arith.constant 0 : i32
    %c0_i32_1 = arith.constant 0 : i32
    return %c0_i32, %c0_i32_0 : i32, i32
  }
  func.func @transform_6(%arg0: i32) -> (i32, i32) {
    %c0_i32 = arith.constant 0 : i32
    %c0_i32_0 = arith.constant 0 : i32
    %c0_i32_1 = arith.constant 0 : i32
    return %c0_i32, %c0_i32_0 : i32, i32
  }
  func.func @transform_7(%arg0: i32) -> (i32, i32, i32) {
    %c0_i32 = arith.constant 0 : i32
    %c0_i32_0 = arith.constant 0 : i32
    %c0_i32_1 = arith.constant 0 : i32
    return %arg0, %c0_i32, %c0_i32_0 : i32, i32, i32
  }
}

module attributes {stable_mosaic.version = 11 : i64} {
  func.func @_attn_onepass_kernel(%arg0: i32, %arg1: i32, %arg2: i32, %arg3: memref<1x32x32xf32, #tpu.memory_space<vmem>>, %arg4: memref<32x32xbf16, #tpu.memory_space<vmem>>, %arg5: memref<1x32xf32, #tpu.memory_space<vmem>>, %arg6: memref<1x16x160xbf16, #tpu.memory_space<vmem>>, %arg7: memref<1x32xf32, #tpu.memory_space<vmem>>, %arg8: memref<1x32x32xf32, #tpu.memory_space<vmem>>) attributes {dimension_semantics = [#tpu.dimension_semantics<parallel>, #tpu.dimension_semantics<parallel>, #tpu.dimension_semantics<arbitrary>], iteration_bounds = array<i64: 2, 2, 1>, scalar_prefetch = 0 : i64, scratch_operands = 0 : i64, tpu.core_type = #tpu.core_type<tc>, window_params = [{transform_indices = @transform_0, window_bounds = array<i64: 1, 32, 32>}, {pipeline_mode = #tpu.pipeline_mode<synchronous>, transform_indices = @transform_1, window_bounds = array<i64: 32, 32>}, {pipeline_mode = #tpu.pipeline_mode<synchronous>, transform_indices = @transform_2, window_bounds = array<i64: 1, 32>}, {transform_indices = @transform_3, window_bounds = array<i64: 1, 16, 160>}, {pipeline_mode = #tpu.pipeline_mode<synchronous>, transform_indices = @transform_4, window_bounds = array<i64: 1, 32>}, {transform_indices = @transform_5, window_bounds = array<i64: 1, 32, 32>}]} {
    %c0 = arith.constant 0 : index
    %c0_0 = arith.constant 0 : index
    %c0_1 = arith.constant 0 : index
    %0 = vector.load %arg3[%c0, %c0_0, %c0_1] : memref<1x32x32xf32, #tpu.memory_space<vmem>>, vector<1x32x32xf32>
    %1 = vector.shape_cast %0 : vector<1x32x32xf32> to vector<32x32xf32>
    %2 = arith.truncf %1 : vector<32x32xf32> to vector<32x32xbf16>
    %c0_2 = arith.constant 0 : index
    %c0_3 = arith.constant 0 : index
    %3 = vector.load %arg4[%c0_2, %c0_3] : memref<32x32xbf16, #tpu.memory_space<vmem>>, vector<32x32xbf16>
    %cst = arith.constant dense<0.000000e+00> : vector<32x32xf32>
    %4 = tpu.matmul %2, %3, %cst {dimension_numbers = #tpu.dot_dimension_numbers<[1], [0], [0], [1], [0, 0, 1, 1], [], []>} : vector<32x32xbf16>, vector<32x32xbf16>, vector<32x32xf32> -> vector<32x32xf32>
    %c0_4 = arith.constant 0 : index
    %c0_5 = arith.constant 0 : index
    %5 = vector.load %arg5[%c0_4, %c0_5] : memref<1x32xf32, #tpu.memory_space<vmem>>, vector<1x32xf32>
    %6 = vector.broadcast %5 : vector<1x32xf32> to vector<32x32xf32>
    %7 = arith.addf %4, %6 : vector<32x32xf32>
    %cst_6 = arith.constant 0.353553385 : f32
    %8 = vector.broadcast %cst_6 : f32 to vector<32x32xf32>
    %9 = arith.mulf %7, %8 : vector<32x32xf32>
    %10 = arith.truncf %9 : vector<32x32xf32> to vector<32x32xbf16>
    %c0_7 = arith.constant 0 : index
    %c0_8 = arith.constant 0 : index
    %c0_9 = arith.constant 0 : index
    %11 = vector.load %arg6[%c0_7, %c0_8, %c0_9] : memref<1x16x160xbf16, #tpu.memory_space<vmem>>, vector<1x16x160xbf16>
    %12 = vector.shape_cast %11 : vector<1x16x160xbf16> to vector<16x160xbf16>
    %13 = vector.extract_strided_slice %10 {offsets = [0, 0], sizes = [32, 8], strides = [1, 1]} : vector<32x32xbf16> to vector<32x8xbf16>
    %14 = vector.extract_strided_slice %12 {offsets = [0, 0], sizes = [16, 8], strides = [1, 1]} : vector<16x160xbf16> to vector<16x8xbf16>
    %cst_10 = arith.constant dense<0.000000e+00> : vector<32x16xf32>
    %15 = tpu.matmul %13, %14, %cst_10 {dimension_numbers = #tpu.dot_dimension_numbers<[1], [1], [0], [0], [0, 0, 1, 0], [], []>} : vector<32x8xbf16>, vector<16x8xbf16>, vector<32x16xf32> -> vector<32x16xf32>
    %cst_11 = arith.constant dense<0xFF800000> : vector<32xf32>
    %16 = vector.multi_reduction <maximumf>, %15, %cst_11 [1] : vector<32x16xf32> to vector<32xf32>
    %17 = vector.shape_cast %16 : vector<32xf32> to vector<32x1xf32>
    %18 = vector.broadcast %17 : vector<32x1xf32> to vector<32x16xf32>
    %19 = arith.subf %15, %18 : vector<32x16xf32>
    %20 = math.exp %19 : vector<32x16xf32>
    %cst_12 = arith.constant dense<0.000000e+00> : vector<32xf32>
    %21 = vector.multi_reduction <add>, %20, %cst_12 [1] : vector<32x16xf32> to vector<32xf32>
    %22 = vector.shape_cast %21 : vector<32xf32> to vector<32x1xf32>
    %23 = tpu.reciprocal %22 {approx = true} : vector<32x1xf32> -> vector<32x1xf32>
    %24 = arith.truncf %20 : vector<32x16xf32> to vector<32x16xbf16>
    %25 = vector.extract_strided_slice %12 {offsets = [0, 32], sizes = [16, 32], strides = [1, 1]} : vector<16x160xbf16> to vector<16x32xbf16>
    %cst_13 = arith.constant dense<0.000000e+00> : vector<32x32xf32>
    %26 = tpu.matmul %24, %25, %cst_13 {dimension_numbers = #tpu.dot_dimension_numbers<[1], [0], [0], [1], [0, 0, 1, 1], [], []>} : vector<32x16xbf16>, vector<16x32xbf16>, vector<32x32xf32> -> vector<32x32xf32>
    %27 = vector.broadcast %23 : vector<32x1xf32> to vector<32x32xf32>
    %28 = arith.mulf %26, %27 : vector<32x32xf32>
    %29 = vector.extract_strided_slice %10 {offsets = [0, 8], sizes = [32, 8], strides = [1, 1]} : vector<32x32xbf16> to vector<32x8xbf16>
    %30 = vector.extract_strided_slice %12 {offsets = [0, 8], sizes = [16, 8], strides = [1, 1]} : vector<16x160xbf16> to vector<16x8xbf16>
    %cst_14 = arith.constant dense<0.000000e+00> : vector<32x16xf32>
    %31 = tpu.matmul %29, %30, %cst_14 {dimension_numbers = #tpu.dot_dimension_numbers<[1], [1], [0], [0], [0, 0, 1, 0], [], []>} : vector<32x8xbf16>, vector<16x8xbf16>, vector<32x16xf32> -> vector<32x16xf32>
    %cst_15 = arith.constant dense<0xFF800000> : vector<32xf32>
    %32 = vector.multi_reduction <maximumf>, %31, %cst_15 [1] : vector<32x16xf32> to vector<32xf32>
    %33 = vector.shape_cast %32 : vector<32xf32> to vector<32x1xf32>
    %34 = vector.broadcast %33 : vector<32x1xf32> to vector<32x16xf32>
    %35 = arith.subf %31, %34 : vector<32x16xf32>
    %36 = math.exp %35 : vector<32x16xf32>
    %cst_16 = arith.constant dense<0.000000e+00> : vector<32xf32>
    %37 = vector.multi_reduction <add>, %36, %cst_16 [1] : vector<32x16xf32> to vector<32xf32>
    %38 = vector.shape_cast %37 : vector<32xf32> to vector<32x1xf32>
    %39 = tpu.reciprocal %38 {approx = true} : vector<32x1xf32> -> vector<32x1xf32>
    %40 = arith.truncf %36 : vector<32x16xf32> to vector<32x16xbf16>
    %41 = vector.extract_strided_slice %12 {offsets = [0, 64], sizes = [16, 32], strides = [1, 1]} : vector<16x160xbf16> to vector<16x32xbf16>
    %cst_17 = arith.constant dense<0.000000e+00> : vector<32x32xf32>
    %42 = tpu.matmul %40, %41, %cst_17 {dimension_numbers = #tpu.dot_dimension_numbers<[1], [0], [0], [1], [0, 0, 1, 1], [], []>} : vector<32x16xbf16>, vector<16x32xbf16>, vector<32x32xf32> -> vector<32x32xf32>
    %43 = vector.broadcast %39 : vector<32x1xf32> to vector<32x32xf32>
    %44 = arith.mulf %42, %43 : vector<32x32xf32>
    %45 = arith.addf %28, %44 : vector<32x32xf32>
    %46 = vector.extract_strided_slice %10 {offsets = [0, 16], sizes = [32, 8], strides = [1, 1]} : vector<32x32xbf16> to vector<32x8xbf16>
    %47 = vector.extract_strided_slice %12 {offsets = [0, 16], sizes = [16, 8], strides = [1, 1]} : vector<16x160xbf16> to vector<16x8xbf16>
    %cst_18 = arith.constant dense<0.000000e+00> : vector<32x16xf32>
    %48 = tpu.matmul %46, %47, %cst_18 {dimension_numbers = #tpu.dot_dimension_numbers<[1], [1], [0], [0], [0, 0, 1, 0], [], []>} : vector<32x8xbf16>, vector<16x8xbf16>, vector<32x16xf32> -> vector<32x16xf32>
    %cst_19 = arith.constant dense<0xFF800000> : vector<32xf32>
    %49 = vector.multi_reduction <maximumf>, %48, %cst_19 [1] : vector<32x16xf32> to vector<32xf32>
    %50 = vector.shape_cast %49 : vector<32xf32> to vector<32x1xf32>
    %51 = vector.broadcast %50 : vector<32x1xf32> to vector<32x16xf32>
    %52 = arith.subf %48, %51 : vector<32x16xf32>
    %53 = math.exp %52 : vector<32x16xf32>
    %cst_20 = arith.constant dense<0.000000e+00> : vector<32xf32>
    %54 = vector.multi_reduction <add>, %53, %cst_20 [1] : vector<32x16xf32> to vector<32xf32>
    %55 = vector.shape_cast %54 : vector<32xf32> to vector<32x1xf32>
    %56 = tpu.reciprocal %55 {approx = true} : vector<32x1xf32> -> vector<32x1xf32>
    %57 = arith.truncf %53 : vector<32x16xf32> to vector<32x16xbf16>
    %58 = vector.extract_strided_slice %12 {offsets = [0, 96], sizes = [16, 32], strides = [1, 1]} : vector<16x160xbf16> to vector<16x32xbf16>
    %cst_21 = arith.constant dense<0.000000e+00> : vector<32x32xf32>
    %59 = tpu.matmul %57, %58, %cst_21 {dimension_numbers = #tpu.dot_dimension_numbers<[1], [0], [0], [1], [0, 0, 1, 1], [], []>} : vector<32x16xbf16>, vector<16x32xbf16>, vector<32x32xf32> -> vector<32x32xf32>
    %60 = vector.broadcast %56 : vector<32x1xf32> to vector<32x32xf32>
    %61 = arith.mulf %59, %60 : vector<32x32xf32>
    %62 = arith.addf %45, %61 : vector<32x32xf32>
    %63 = vector.extract_strided_slice %10 {offsets = [0, 24], sizes = [32, 8], strides = [1, 1]} : vector<32x32xbf16> to vector<32x8xbf16>
    %64 = vector.extract_strided_slice %12 {offsets = [0, 24], sizes = [16, 8], strides = [1, 1]} : vector<16x160xbf16> to vector<16x8xbf16>
    %cst_22 = arith.constant dense<0.000000e+00> : vector<32x16xf32>
    %65 = tpu.matmul %63, %64, %cst_22 {dimension_numbers = #tpu.dot_dimension_numbers<[1], [1], [0], [0], [0, 0, 1, 0], [], []>} : vector<32x8xbf16>, vector<16x8xbf16>, vector<32x16xf32> -> vector<32x16xf32>
    %cst_23 = arith.constant dense<0xFF800000> : vector<32xf32>
    %66 = vector.multi_reduction <maximumf>, %65, %cst_23 [1] : vector<32x16xf32> to vector<32xf32>
    %67 = vector.shape_cast %66 : vector<32xf32> to vector<32x1xf32>
    %68 = vector.broadcast %67 : vector<32x1xf32> to vector<32x16xf32>
    %69 = arith.subf %65, %68 : vector<32x16xf32>
    %70 = math.exp %69 : vector<32x16xf32>
    %cst_24 = arith.constant dense<0.000000e+00> : vector<32xf32>
    %71 = vector.multi_reduction <add>, %70, %cst_24 [1] : vector<32x16xf32> to vector<32xf32>
    %72 = vector.shape_cast %71 : vector<32xf32> to vector<32x1xf32>
    %73 = tpu.reciprocal %72 {approx = true} : vector<32x1xf32> -> vector<32x1xf32>
    %74 = arith.truncf %70 : vector<32x16xf32> to vector<32x16xbf16>
    %75 = vector.extract_strided_slice %12 {offsets = [0, 128], sizes = [16, 32], strides = [1, 1]} : vector<16x160xbf16> to vector<16x32xbf16>
    %cst_25 = arith.constant dense<0.000000e+00> : vector<32x32xf32>
    %76 = tpu.matmul %74, %75, %cst_25 {dimension_numbers = #tpu.dot_dimension_numbers<[1], [0], [0], [1], [0, 0, 1, 1], [], []>} : vector<32x16xbf16>, vector<16x32xbf16>, vector<32x32xf32> -> vector<32x32xf32>
    %77 = vector.broadcast %73 : vector<32x1xf32> to vector<32x32xf32>
    %78 = arith.mulf %76, %77 : vector<32x32xf32>
    %79 = arith.addf %62, %78 : vector<32x32xf32>
    %c0_26 = arith.constant 0 : index
    %c0_27 = arith.constant 0 : index
    %80 = vector.load %arg7[%c0_26, %c0_27] : memref<1x32xf32, #tpu.memory_space<vmem>>, vector<1x32xf32>
    %81 = vector.broadcast %80 : vector<1x32xf32> to vector<32x32xf32>
    %82 = arith.addf %79, %81 : vector<32x32xf32>
    %c0_28 = arith.constant 0 : index
    %c0_29 = arith.constant 0 : index
    %c0_30 = arith.constant 0 : index
    %83 = vector.load %arg8[%c0_28, %c0_29, %c0_30] : memref<1x32x32xf32, #tpu.memory_space<vmem>>, vector<1x32x32xf32>
    %84 = vector.shape_cast %83 : vector<1x32x32xf32> to vector<32x32xf32>
    %85 = vector.shape_cast %82 : vector<32x32xf32> to vector<1x32x32xf32>
    tpu.vector_store %arg8[%c0_28, %c0_29, %c0_30], %85 {strides = array<i32>} : memref<1x32x32xf32, #tpu.memory_space<vmem>>, vector<1x32x32xf32>,
    return
  }
  func.func @transform_0(%arg0: i32, %arg1: i32, %arg2: i32) -> (i32, i32, i32) {
    %c0_i32 = arith.constant 0 : i32
    %c0_i32_0 = arith.constant 0 : i32
    return %arg0, %arg1, %c0_i32 : i32, i32, i32
  }
  func.func @transform_1(%arg0: i32, %arg1: i32, %arg2: i32) -> (i32, i32) {
    %c0_i32 = arith.constant 0 : i32
    %c0_i32_0 = arith.constant 0 : i32
    %c0_i32_1 = arith.constant 0 : i32
    return %c0_i32, %c0_i32_0 : i32, i32
  }
  func.func @transform_2(%arg0: i32, %arg1: i32, %arg2: i32) -> (i32, i32) {
    %c0_i32 = arith.constant 0 : i32
    %c0_i32_0 = arith.constant 0 : i32
    %c0_i32_1 = arith.constant 0 : i32
    return %c0_i32, %c0_i32_0 : i32, i32
  }
  func.func @transform_3(%arg0: i32, %arg1: i32, %arg2: i32) -> (i32, i32, i32) {
    %c0_i32 = arith.constant 0 : i32
    %c0_i32_0 = arith.constant 0 : i32
    return %arg0, %arg2, %c0_i32 : i32, i32, i32
  }
  func.func @transform_4(%arg0: i32, %arg1: i32, %arg2: i32) -> (i32, i32) {
    %c0_i32 = arith.constant 0 : i32
    %c0_i32_0 = arith.constant 0 : i32
    %c0_i32_1 = arith.constant 0 : i32
    return %c0_i32, %c0_i32_0 : i32, i32
  }
  func.func @transform_5(%arg0: i32, %arg1: i32, %arg2: i32) -> (i32, i32, i32) {
    %c0_i32 = arith.constant 0 : i32
    %c0_i32_0 = arith.constant 0 : i32
    return %arg0, %arg1, %c0_i32 : i32, i32, i32
  }
}

</mosaic_0001>

<llo_original>
// kernel: multi_head_attention.2
$region0: #{multi_head_attention.2}
  #allocation0 [shape = 'u32[]', space=smem, size = 0x4, offset = 0x4, fixed_abs, tag = 'smem constant byte address 0x4 - core index']
  #allocation1 [shape = 'u32[144,128]{1,0:T(1,128)}', space=vmem, size = 0x12000, scoped, tag = 'internal scratch']
  %s0 = inlined_call_operand.vmem [shape: f32[2,16,128], index: 0, kind: input, shape index: {}]
  %s1 = inlined_call_operand.vmem [shape: bf16[128,32], index: 1, kind: input, shape index: {}]
  %s2 = inlined_call_operand.vmem [shape: f32[1,32], index: 2, kind: input, shape index: {}]
  %s3 = inlined_call_operand.vmem [shape: f32[1,32], index: 3, kind: input, shape index: {}]
  %s4 = inlined_call_operand.vmem [shape: f32[1,32], index: 4, kind: input, shape index: {}]
  %s5 = inlined_call_operand.vmem [shape: bf16[32,160], index: 5, kind: input, shape index: {}]
  %s6 = inlined_call_operand.vmem [shape: f32[1,160], index: 6, kind: input, shape index: {}]
  %s7 = inlined_call_operand.vmem [shape: bf16[2,16,160], index: 7, kind: output, shape index: {}]
  %s8 = sld [smem:[#allocation0]]
  $region61: #{multi_head_attention.2} parent=0
    _
  %s10 = ssub.s32 1, %s8
  %s11 = scalar_select 0, %s10, %s8
  loop: start=0, step=1, limit=4
  $region2: #{multi_head_attention.2} parent=0 // loop_pre_header
    _
  $region3: #{multi_head_attention.2} parent=0 // loop_header
    %s13 = sphi 0, %s17
    %p14 = scmp.ge.s32.totalorder %s13, 4
    %s23 = sphi 0, %s25
    %s26 = sphi 0, %s23
    %s27 = sphi 0, %s26
    %s43 = sphi 0, %s27
    %s47 = sphi 0, %s47
    %s49 = sphi 0, %s47
    %s50 = sphi 0, %s49
    %s64 = sphi 0, %s50
    %s68 = sphi 0, %s68
    %s70 = sphi 0, %s68
    %s71 = sphi 0, %s70
    %s85 = sphi 0, %s71
    %s89 = sphi 0, %s89
    %s91 = sphi 0, %s89
    %s92 = sphi 0, %s91
    %s106 = sphi 0, %s92
    %s110 = sphi 0, %s110
    %s112 = sphi 0, %s110
    %s113 = sphi 0, %s112
    %s127 = sphi 0, %s113
    %s131 = sphi 0, %s131
    %s133 = sphi 0, %s131
    %s134 = sphi 0, %s133
    %s148 = sphi 0, %s134
    %s152 = sphi 0, %s152
    %s154 = sphi 0, %s152
    %s155 = sphi 0, %s154
    %s169 = sphi 0, %s155
    %s175 = sphi 0, %s177
    %s178 = sphi 0, %s175
    %s179 = sphi 0, %s178
    %s195 = sphi 0, %s179
  $region4: #{multi_head_attention.2} parent=0 // loop_header_branch
    %16 = sbr.rel (%p14) target = $region8
  $region5: #{multi_head_attention.2} parent=0 // loop_body
    %s18 = ssub.s32 %s13, 1
    %s19 = ssub.s32 %s13, 2
    %s20 = sadd.s32 %s13, 1
    %s21 = ssub.s32 %s13, %s20
    %p22 = scmp.eq.s32.totalorder %s21, 0
    %s24 = sadd.s32 %s23, 1
    %s25 = scalar_select %p22, %s23, %s24
    %p28 = pneg %p22
    %p29 = scmp.eq.s32.totalorder %s13, 1
    %p30 = por %p28, %p29
    %p31 = scmp.ne.s32.totalorder %s23, %s26
    %p32 = scmp.eq.s32.totalorder %s13, 0
    %p33 = por %p31, %p32
    %p34 = scmp.ne.s32.totalorder %s23, %s26
    %p35 = scmp.eq.s32.totalorder %s18, 1
    %p36 = por %p34, %p35
    %p37 = scmp.ne.s32.totalorder %s26, %s27
    %p38 = scmp.eq.s32.totalorder %s18, 0
    %p39 = por %p37, %p38
    %p40 = scmp.ne.s32.totalorder %s26, %s27
    %p41 = scmp.eq.s32.totalorder %s19, 1
    %p42 = por %p40, %p41
    %p44 = scmp.ne.s32.totalorder %s27, %s43
    %p45 = scmp.eq.s32.totalorder %s19, 0
    %p46 = por %p44, %p45
    %s48 = sadd.s32 %s47, 1
    %p51 = scmp.eq.s32.totalorder %s13, 1
    %p52 = scmp.ne.s32.totalorder %s47, %s49
    %p53 = scmp.eq.s32.totalorder %s13, 0
    %p54 = por %p52, %p53
    %p55 = scmp.ne.s32.totalorder %s47, %s49
    %p56 = scmp.eq.s32.totalorder %s18, 1
    %p57 = por %p55, %p56
    %p58 = scmp.ne.s32.totalorder %s49, %s50
    %p59 = scmp.eq.s32.totalorder %s18, 0
    %p60 = por %p58, %p59
    %p61 = scmp.ne.s32.totalorder %s49, %s50
    %p62 = scmp.eq.s32.totalorder %s19, 1
    %p63 = por %p61, %p62
    %p65 = scmp.ne.s32.totalorder %s50, %s64
    %p66 = scmp.eq.s32.totalorder %s19, 0
    %p67 = por %p65, %p66
    %s69 = sadd.s32 %s68, 1
    %p72 = scmp.eq.s32.totalorder %s13, 1
    %p73 = scmp.ne.s32.totalorder %s68, %s70
    %p74 = scmp.eq.s32.totalorder %s13, 0
    %p75 = por %p73, %p74
    %p76 = scmp.ne.s32.totalorder %s68, %s70
    %p77 = scmp.eq.s32.totalorder %s18, 1
    %p78 = por %p76, %p77
    %p79 = scmp.ne.s32.totalorder %s70, %s71
    %p80 = scmp.eq.s32.totalorder %s18, 0
    %p81 = por %p79, %p80
    %p82 = scmp.ne.s32.totalorder %s70, %s71
    %p83 = scmp.eq.s32.totalorder %s19, 1
    %p84 = por %p82, %p83
    %p86 = scmp.ne.s32.totalorder %s71, %s85
    %p87 = scmp.eq.s32.totalorder %s19, 0
    %p88 = por %p86, %p87
    %s90 = sadd.s32 %s89, 1
    %p93 = scmp.eq.s32.totalorder %s13, 1
    %p94 = scmp.ne.s32.totalorder %s89, %s91
    %p95 = scmp.eq.s32.totalorder %s13, 0
    %p96 = por %p94, %p95
    %p97 = scmp.ne.s32.totalorder %s89, %s91
    %p98 = scmp.eq.s32.totalorder %s18, 1
    %p99 = por %p97, %p98
    %p100 = scmp.ne.s32.totalorder %s91, %s92
    %p101 = scmp.eq.s32.totalorder %s18, 0
    %p102 = por %p100, %p101
    %p103 = scmp.ne.s32.totalorder %s91, %s92
    %p104 = scmp.eq.s32.totalorder %s19, 1
    %p105 = por %p103, %p104
    %p107 = scmp.ne.s32.totalorder %s92, %s106
    %p108 = scmp.eq.s32.totalorder %s19, 0
    %p109 = por %p107, %p108
    %s111 = sadd.s32 %s110, 1
    %p114 = scmp.eq.s32.totalorder %s13, 1
    %p115 = scmp.ne.s32.totalorder %s110, %s112
    %p116 = scmp.eq.s32.totalorder %s13, 0
    %p117 = por %p115, %p116
    %p118 = scmp.ne.s32.totalorder %s110, %s112
    %p119 = scmp.eq.s32.totalorder %s18, 1
    %p120 = por %p118, %p119
    %p121 = scmp.ne.s32.totalorder %s112, %s113
    %p122 = scmp.eq.s32.totalorder %s18, 0
    %p123 = por %p121, %p122
    %p124 = scmp.ne.s32.totalorder %s112, %s113
    %p125 = scmp.eq.s32.totalorder %s19, 1
    %p126 = por %p124, %p125
    %p128 = scmp.ne.s32.totalorder %s113, %s127
    %p129 = scmp.eq.s32.totalorder %s19, 0
    %p130 = por %p128, %p129
    %s132 = sadd.s32 %s131, 1
    %p135 = scmp.eq.s32.totalorder %s13, 1
    %p136 = scmp.ne.s32.totalorder %s131, %s133
    %p137 = scmp.eq.s32.totalorder %s13, 0
    %p138 = por %p136, %p137
    %p139 = scmp.ne.s32.totalorder %s131, %s133
    %p140 = scmp.eq.s32.totalorder %s18, 1
    %p141 = por %p139, %p140
    %p142 = scmp.ne.s32.totalorder %s133, %s134
    %p143 = scmp.eq.s32.totalorder %s18, 0
    %p144 = por %p142, %p143
    %p145 = scmp.ne.s32.totalorder %s133, %s134
    %p146 = scmp.eq.s32.totalorder %s19, 1
    %p147 = por %p145, %p146
    %p149 = scmp.ne.s32.totalorder %s134, %s148
    %p150 = scmp.eq.s32.totalorder %s19, 0
    %p151 = por %p149, %p150
    %s153 = sadd.s32 %s152, 1
    %p156 = scmp.eq.s32.totalorder %s13, 1
    %p157 = scmp.ne.s32.totalorder %s152, %s154
    %p158 = scmp.eq.s32.totalorder %s13, 0
    %p159 = por %p157, %p158
    %p160 = scmp.ne.s32.totalorder %s152, %s154
    %p161 = scmp.eq.s32.totalorder %s18, 1
    %p162 = por %p160, %p161
    %p163 = scmp.ne.s32.totalorder %s154, %s155
    %p164 = scmp.eq.s32.totalorder %s18, 0
    %p165 = por %p163, %p164
    %p166 = scmp.ne.s32.totalorder %s154, %s155
    %p167 = scmp.eq.s32.totalorder %s19, 1
    %p168 = por %p166, %p167
    %p170 = scmp.ne.s32.totalorder %s155, %s169
    %p171 = scmp.eq.s32.totalorder %s19, 0
    %p172 = por %p170, %p171
    %s173 = ssub.s32 %s13, %s20
    %p174 = scmp.eq.s32.totalorder %s173, 0
    %s176 = sadd.s32 %s175, 1
    %s177 = scalar_select %p174, %s175, %s176
    %p180 = pneg %p174
    %p181 = scmp.eq.s32.totalorder %s13, 1
    %p182 = por %p180, %p181
    %p183 = scmp.ne.s32.totalorder %s175, %s178
    %p184 = scmp.eq.s32.totalorder %s13, 0
    %p185 = por %p183, %p184
    %p186 = scmp.ne.s32.totalorder %s175, %s178
    %p187 = scmp.eq.s32.totalorder %s18, 1
    %p188 = por %p186, %p187
    %p189 = scmp.ne.s32.totalorder %s178, %s179
    %p190 = scmp.eq.s32.totalorder %s18, 0
    %p191 = por %p189, %p190
    %p192 = scmp.ne.s32.totalorder %s178, %s179
    %p193 = scmp.eq.s32.totalorder %s19, 1
    %p194 = por %p192, %p193
    %p196 = scmp.ne.s32.totalorder %s179, %s195
    %p197 = scmp.eq.s32.totalorder %s19, 0
    %p198 = por %p196, %p197
    %p199 = scmp.le.s32.totalorder 1, %s13
    %p200 = scmp.lt.s32.totalorder %s13, 3
    %p201 = pnand %p199, %p200
    %p202 = pneg %p201
    // Predicated region
    $region9: #{multi_head_attention.2} parent=5 // pred_check
      _
    $region10: #{multi_head_attention.2} parent=5 // pred_check_branch
      %204 = sbr.rel (%p201) target = $region12
    $region11: #{multi_head_attention.2} parent=5 // pred_region
      %s205 = ssub.s32 %s13, 1
      // Predicated region
      $region13: #{multi_head_attention.2} parent=11 // pred_check
        %p206 = pneg %p60
      $region14: #{multi_head_attention.2} parent=11 // pred_check_branch
        %208 = sbr.rel (%p206) target = $region16
      $region15: #{multi_head_attention.2} parent=11 // pred_region
        _
      $region16: #{multi_head_attention.2} parent=11 // pred_fallthru
        _
      // Predicated region
      $region17: #{multi_head_attention.2} parent=11 // pred_check
        %p209 = pneg %p81
      $region18: #{multi_head_attention.2} parent=11 // pred_check_branch
        %211 = sbr.rel (%p209) target = $region20
      $region19: #{multi_head_attention.2} parent=11 // pred_region
        _
      $region20: #{multi_head_attention.2} parent=11 // pred_fallthru
        _
      // Predicated region
      $region21: #{multi_head_attention.2} parent=11 // pred_check
        %p212 = pneg %p102
      $region22: #{multi_head_attention.2} parent=11 // pred_check_branch
        %214 = sbr.rel (%p212) target = $region24
      $region23: #{multi_head_attention.2} parent=11 // pred_region
        _
      $region24: #{multi_head_attention.2} parent=11 // pred_fallthru
        _
      // Predicated region
      $region25: #{multi_head_attention.2} parent=11 // pred_check
        %p215 = pneg %p123
      $region26: #{multi_head_attention.2} parent=11 // pred_check_branch
        %217 = sbr.rel (%p215) target = $region28
      $region27: #{multi_head_attention.2} parent=11 // pred_region
        _
      $region28: #{multi_head_attention.2} parent=11 // pred_fallthru
        _
      // Predicated region
      $region29: #{multi_head_attention.2} parent=11 // pred_check
        %p218 = pneg %p144
      $region30: #{multi_head_attention.2} parent=11 // pred_check_branch
        %220 = sbr.rel (%p218) target = $region32
      $region31: #{multi_head_attention.2} parent=11 // pred_region
        _
      $region32: #{multi_head_attention.2} parent=11 // pred_fallthru
        _
      // Predicated region
      $region33: #{multi_head_attention.2} parent=11 // pred_check
        %p221 = pneg %p165
      $region34: #{multi_head_attention.2} parent=11 // pred_check_branch
        %223 = sbr.rel (%p221) target = $region36
      $region35: #{multi_head_attention.2} parent=11 // pred_region
        _
      $region36: #{multi_head_attention.2} parent=11 // pred_fallthru
        _
    $region12: #{multi_head_attention.2} parent=5 // pred_fallthru
      _
    %p224 = scmp.lt.s32.totalorder %s13, 2
    // Predicated region
    $region37: #{multi_head_attention.2} parent=5 // pred_check
      %p225 = pneg %p224
    $region38: #{multi_head_attention.2} parent=5 // pred_check_branch
      %227 = sbr.rel (%p225) target = $region40
    $region39: #{multi_head_attention.2} parent=5 // pred_region
      // Predicated region
      $region41: #{multi_head_attention.2} parent=39 // pred_check
        %p228 = pneg %p33
      $region42: #{multi_head_attention.2} parent=39 // pred_check_branch
        %230 = sbr.rel (%p228) target = $region44
      $region43: #{multi_head_attention.2} parent=39 // pred_region
        %p231 = scmp.lt.s32.totalorder %s13, 1
        %s232 = scalar_select %p231, %s13, 1
        %s233 = smul.addr %s232, 2
        %s234 = smul.addr %s233, 8
        %s235 = scalar_lea.vmem %s0, %s234
      $region44: #{multi_head_attention.2} parent=39 // pred_fallthru
        _
    $region40: #{multi_head_attention.2} parent=5 // pred_fallthru
      _
    %p236 = scmp.le.s32.totalorder 1, %s13
    %p237 = scmp.lt.s32.totalorder %s13, 3
    %p238 = pnand %p236, %p237
    %p239 = pneg %p238
    // Predicated region
    $region45: #{multi_head_attention.2} parent=5 // pred_check
      _
    $region46: #{multi_head_attention.2} parent=5 // pred_check_branch
      %241 = sbr.rel (%p238) target = $region48
    $region47: #{multi_head_attention.2} parent=5 // pred_region
      %s242 = ssub.s32 %s13, 1
      %p243 = scmp.lt.s32.totalorder %s18, 1
      %s244 = scalar_select %p243, %s18, 1
      %s245 = smul.addr %s244, 2
      %s246 = smul.addr %s245, 8
      %s247 = scalar_lea.vmem %s0, %s246
      %p248 = pneg %p39
      %p249 = pneg %p36
      %p250 = pneg %p60
      %p251 = pneg %p57
      %p252 = pneg %p81
      %p253 = pneg %p78
      %p254 = pneg %p102
      %p255 = pneg %p99
      %p256 = pneg %p123
      %p257 = pneg %p120
      %p258 = pneg %p144
      %p259 = pneg %p141
      %p260 = pneg %p165
      %p261 = pneg %p162
      %p262 = pneg %p191
      %p263 = pneg %p188
      %p264 = scmp.lt.s32.totalorder %s18, 1
      %s265 = scalar_select %p264, %s18, 1
      %s266 = smul.addr %s265, 4
      %s267 = smul.addr %s266, 4
      %s268 = scalar_lea.vmem %s7, %s267
      %p269 = scmp.lt.s32.totalorder %s18, 1
      %s270 = scalar_select %p269, %s18, 1
      %s271 = smul.addr %s270, 2
      %s272 = smul.addr %s271, 8
      %s273 = scalar_lea.vmem %s0, %s272
      %p274 = scmp.lt.s32.totalorder %s18, 1
      %s275 = scalar_select %p274, %s18, 1
      %s276 = smul.addr %s275, 4
      %s277 = smul.addr %s276, 4
      %s278 = scalar_lea.vmem %s7, %s277
      %v280 = vld [vmem:[%s273] sm:$0xff]
      %v281 = vld [vmem:[%s273 + $0x8] sm:$0xff]
      %v282 = vpack.c.bf16 %v281, %v280
      %v283 = vld [vmem:[%s1] sm:$0xf]
      %v284 = vld [vmem:[%s1 + $0x4] sm:$0xf]
      %v285 = vld [vmem:[%s1 + $0x8] sm:$0xf]
      %v286 = vld [vmem:[%s1 + $0xc] sm:$0xf]
      %v287 = vld [vmem:[%s1 + $0x10] sm:$0xf]
      %v288 = vld [vmem:[%s1 + $0x14] sm:$0xf]
      %v289 = vld [vmem:[%s1 + $0x18] sm:$0xf]
      %v290 = vld [vmem:[%s1 + $0x1c] sm:$0xf]
      %v291 = vld [vmem:[%s1 + $0x20] sm:$0xf]
      %v292 = vld [vmem:[%s1 + $0x24] sm:$0xf]
      %v293 = vld [vmem:[%s1 + $0x28] sm:$0xf]
      %v294 = vld [vmem:[%s1 + $0x2c] sm:$0xf]
      %v295 = vld [vmem:[%s1 + $0x30] sm:$0xf]
      %v296 = vld [vmem:[%s1 + $0x34] sm:$0xf]
      %v297 = vld [vmem:[%s1 + $0x38] sm:$0xf]
      %v298 = vld [vmem:[%s1 + $0x3c] sm:$0xf]
      %v299 = vld [vmem:[%s2] sm:$0x1]
      %v301 = vlaneseq
      %v302 = vshrl.u32 %v301, 7
      %v303 = vsub.s32 0, %v302
      %v304 = vrot.slane %v299, %v303
      %v322 = vunpack.c.l.b16 %v283
      %v323 = vunpack.c.l.b16 %v284
      %v324 = vunpack.c.l.b16 %v285
      %v325 = vunpack.c.l.b16 %v286
      %v326 = vunpack.c.l.b16 %v287
      %v327 = vunpack.c.l.b16 %v288
      %v328 = vunpack.c.l.b16 %v289
      %v329 = vunpack.c.l.b16 %v290
      %v330 = vunpack.c.l.b16 %v291
      %v331 = vunpack.c.l.b16 %v292
      %v332 = vunpack.c.l.b16 %v293
      %v333 = vunpack.c.l.b16 %v294
      %v334 = vunpack.c.l.b16 %v295
      %v335 = vunpack.c.l.b16 %v296
      %v336 = vunpack.c.l.b16 %v297
      %v337 = vunpack.c.l.b16 %v298
      %v338 = vpack.c.b16 %v323, %v322
      %v339 = vpack.c.b16 %v325, %v324
      %v340 = vpack.c.b16 %v327, %v326
      %v341 = vpack.c.b16 %v329, %v328
      %v342 = vpack.c.b16 %v331, %v330
      %v343 = vpack.c.b16 %v333, %v332
      %v344 = vpack.c.b16 %v335, %v334
      %v345 = vpack.c.b16 %v337, %v336
      %354 = vmatprep.subr.bf16.mxu0 0
      %355 = vmatpush1.bf16.msra.mxu0 %v338
      %356 = vmatprep.subr.bf16.mxu0 0
      %357 = vmatpush1.bf16.msra.mxu0 %v339
      %358 = vmatprep.subr.bf16.mxu0 0
      %359 = vmatpush1.bf16.msra.mxu0 %v340
      %360 = vmatprep.subr.bf16.mxu0 0
      %361 = vmatpush1.bf16.msra.mxu0 %v341
      %362 = vmatprep.subr.bf16.mxu0 0
      %363 = vmatpush1.bf16.msra.mxu0 %v342
      %364 = vmatprep.subr.bf16.mxu0 0
      %365 = vmatpush1.bf16.msra.mxu0 %v343
      %366 = vmatprep.subr.bf16.mxu0 0
      %367 = vmatpush1.bf16.msra.mxu0 %v344
      %368 = vmatprep.subr.bf16.mxu0 0
      %369 = vmatpush1.bf16.msra.mxu0 %v345
      %370 = vmatprep.subr.bf16.mxu0 0
      %371 = vmatpush1.bf16.msra.mxu0 0
      %372 = vmatprep.subr.bf16.mxu0 0
      %373 = vmatpush1.bf16.msra.mxu0 0
      %374 = vmatprep.subr.bf16.mxu0 0
      %375 = vmatpush1.bf16.msra.mxu0 0
      %376 = vmatprep.subr.bf16.mxu0 0
      %377 = vmatpush1.bf16.msra.mxu0 0
      %378 = vmatprep.subr.bf16.mxu0 0
      %379 = vmatpush1.bf16.msra.mxu0 0
      %380 = vmatprep.subr.bf16.mxu0 0
      %381 = vmatpush1.bf16.msra.mxu0 0
      %382 = vmatprep.subr.bf16.mxu0 0
      %383 = vmatpush1.bf16.msra.mxu0 0
      %384 = vmatprep.subr.bf16.mxu0 0
      %385 = vmatpush1.bf16.msra.mxu0 0
      %386 = vmatprep.mubr.bf16.mxu0 0
      %387 = vmatmul.mubr.bf16.gmra.mrb[0].mxu0 %v282
      %v388 = vpop.f32.mrb[0].mxu0
      %v389 = vadd.f32 %v304, %v388
      %v390 = vpop.f32.mrb[0].mxu0
      %v391 = vpop.f32.mrb[0].mxu0
      %v392 = vadd.f32 %v304, %v391
      %v393 = vpop.f32.mrb[0].mxu0
      %394 = vdwg.mxu0
      %vm395 = vcmask 261120
      %v396 = vsel %vm395, %v389, 0.0
      %397 = vadd.xlane.f32.xlu0 %v396
      %v398 = vpop.xlane.xlu0 %397
      %v399 = vsel %vm395, %v392, 0.0
      %400 = vadd.xlane.f32.xlu0 %v399
      %v401 = vpop.xlane.xlu0 %400
      %v402 = vrcp.pop 32.0
      %v403 = vmul.f32 %v398, %v402
      %v404 = vmul.f32 %v401, %v402
      %v405 = vsub.f32 %v389, %v403
      %v406 = vsub.f32 %v392, %v404
      %v407 = vmul.f32 %v405, %v405
      %v408 = vmul.f32 %v406, %v406
      %v409 = vsel %vm395, %v407, 0.0
      %410 = vadd.xlane.f32.xlu0 %v409
      %v411 = vpop.xlane.xlu0 %410
      %v412 = vsel %vm395, %v408, 0.0
      %413 = vadd.xlane.f32.xlu0 %v412
      %v414 = vpop.xlane.xlu0 %413
      %v415 = vmul.f32 %v411, %v402
      %v416 = vmul.f32 %v414, %v402
      %v417 = vadd.f32 %v415, 1e-05
      %v418 = vadd.f32 %v416, 1e-05
      %v419 = vrsqrt.pop %v417
      %v420 = vrsqrt.pop %v418
      %v421 = vmul.f32 %v405, %v419
      %v422 = vmul.f32 %v406, %v420
      %v423 = vld [vmem:[%s3] sm:$0x1]
      %v425 = vlaneseq
      %v426 = vshrl.u32 %v425, 7
      %v427 = vsub.s32 0, %v426
      %v428 = vrot.slane %v423, %v427
      %v430 = vmul.f32 %v421, %v428
      %v431 = vmul.f32 %v422, %v428
      %v432 = vld [vmem:[%s4] sm:$0x1]
      %v434 = vlaneseq
      %v435 = vshrl.u32 %v434, 7
      %v436 = vsub.s32 0, %v435
      %v437 = vrot.slane %v432, %v436
      %v439 = vadd.f32 %v430, %v437
      %v440 = vadd.f32 %v431, %v437
      %v441 = vpack.c.bf16 %v440, %v439
      %v442 = vld [vmem:[%s5] sm:$0xff]
      %v443 = vld [vmem:[%s5 + $0x8] sm:$0xff]
      %v444 = vld [vmem:[%s5 + $0x10] sm:$0xff]
      %v445 = vld [vmem:[%s5 + $0x18] sm:$0xff]
      %v446 = vld [vmem:[%s6] sm:$0x3]
      %v448 = vlaneseq
      %v449 = vshrl.u32 %v448, 7
      %v450 = vsub.s32 0, %v449
      %v451 = vrot.slane %v446, %v450
      %v452 = vlaneseq
      %v453 = vshrl.u32 %v452, 7
      %v454 = vsub.s32 1, %v453
      %v455 = vrot.slane %v446, %v454
      %v462 = vunpack.c.l.b16 %v442
      %v463 = vunpack.c.h.b16 %v442
      %v464 = vunpack.c.l.b16 %v443
      %v465 = vunpack.c.h.b16 %v443
      %v466 = vunpack.c.l.b16 %v444
      %v467 = vunpack.c.h.b16 %v444
      %v468 = vunpack.c.l.b16 %v445
      %v469 = vunpack.c.h.b16 %v445
      %v470 = vpack.c.b16 %v464, %v462
      %v471 = vpack.c.b16 %v465, %v463
      %v472 = vpack.c.b16 %v468, %v466
      %v473 = vpack.c.b16 %v469, %v467
      %v479 = vsel %vm395, %v441, 0
      %481 = vmatprep.subr.bf16.mxu0 %v471
      %482 = vmatpush1.bf16.msra.mxu0 %v470
      %483 = vmatprep.subr.bf16.mxu0 %v473
      %484 = vmatpush1.bf16.msra.mxu0 %v472
      %485 = vmatprep.subr.bf16.mxu0 0
      %486 = vmatpush1.bf16.msra.mxu0 0
      %487 = vmatprep.subr.bf16.mxu0 0
      %488 = vmatpush1.bf16.msra.mxu0 0
      %489 = vmatprep.subr.bf16.mxu0 0
      %490 = vmatpush1.bf16.msra.mxu0 0
      %491 = vmatprep.subr.bf16.mxu0 0
      %492 = vmatpush1.bf16.msra.mxu0 0
      %493 = vmatprep.subr.bf16.mxu0 0
      %494 = vmatpush1.bf16.msra.mxu0 0
      %495 = vmatprep.subr.bf16.mxu0 0
      %496 = vmatpush1.bf16.msra.mxu0 0
      %497 = vmatprep.subr.bf16.mxu0 0
      %498 = vmatpush1.bf16.msra.mxu0 0
      %499 = vmatprep.subr.bf16.mxu0 0
      %500 = vmatpush1.bf16.msra.mxu0 0
      %501 = vmatprep.subr.bf16.mxu0 0
      %502 = vmatpush1.bf16.msra.mxu0 0
      %503 = vmatprep.subr.bf16.mxu0 0
      %504 = vmatpush1.bf16.msra.mxu0 0
      %505 = vmatprep.subr.bf16.mxu0 0
      %506 = vmatpush1.bf16.msra.mxu0 0
      %507 = vmatprep.subr.bf16.mxu0 0
      %508 = vmatpush1.bf16.msra.mxu0 0
      %509 = vmatprep.subr.bf16.mxu0 0
      %510 = vmatpush1.bf16.msra.mxu0 0
      %511 = vmatprep.subr.bf16.mxu0 0
      %512 = vmatpush1.bf16.msra.mxu0 0
      %513 = vmatprep.mubr.bf16.mxu0 0
      %514 = vmatmul.mubr.bf16.gmra.mrb[0].mxu0 %v479
      %v515 = vpop.f32.mrb[0].mxu0
      %v516 = vadd.f32 %v451, %v515
      %v517 = vpop.f32.mrb[0].mxu0
      %v518 = vadd.f32 %v455, %v517
      %v519 = vpop.f32.mrb[0].mxu0
      %v520 = vadd.f32 %v451, %v519
      %v521 = vpop.f32.mrb[0].mxu0
      %v522 = vadd.f32 %v455, %v521
      %523 = vdwg.mxu0
      %v524 = vpack.c.bf16 %v520, %v516
      %v525 = vpack.c.bf16 %v522, %v518
      %v528 = vunpack.c.l.b16 %v524
      %v529 = vunpack.c.l.b16 %v525
      %v530 = vunpack.c.h.b16 %v524
      %v531 = vunpack.c.h.b16 %v525
      %v532 = vpack.c.b16 %v529, %v528
      %v533 = vpack.c.b16 %v531, %v530
      %vm536 = vcmask 1043456
      %vm537 = vcmask 261124
      %vm538 = vmor %vm537, %vm536
      %539 = vst.msk [vmem:[%s278] sm:$0xff] %vm538, %v532
      %540 = vst.msk [vmem:[%s278 + $0x8] sm:$0xff] %vm538, %v533
      %p541 = scmp.lt.s32.totalorder %s18, 1
      %s542 = scalar_select %p541, %s18, 1
      %s543 = smul.addr %s542, 4
      %s544 = smul.addr %s543, 4
      %s545 = scalar_lea.vmem %s7, %s544
      // Predicated region
      $region49: #{multi_head_attention.2} parent=47 // pred_check
        %p546 = pneg %p188
      $region50: #{multi_head_attention.2} parent=47 // pred_check_branch
        %548 = sbr.rel (%p546) target = $region52
      $region51: #{multi_head_attention.2} parent=47 // pred_region
        _
      $region52: #{multi_head_attention.2} parent=47 // pred_fallthru
        _
    $region48: #{multi_head_attention.2} parent=5 // pred_fallthru
      _
    %p549 = scmp.le.s32.totalorder 2, %s13
    // Predicated region
    $region53: #{multi_head_attention.2} parent=5 // pred_check
      %p550 = pneg %p549
    $region54: #{multi_head_attention.2} parent=5 // pred_check_branch
      %552 = sbr.rel (%p550) target = $region56
    $region55: #{multi_head_attention.2} parent=5 // pred_region
      %s553 = ssub.s32 %s13, 2
      // Predicated region
      $region57: #{multi_head_attention.2} parent=55 // pred_check
        %p554 = pneg %p194
      $region58: #{multi_head_attention.2} parent=55 // pred_check_branch
        %556 = sbr.rel (%p554) target = $region60
      $region59: #{multi_head_attention.2} parent=55 // pred_region
        %p557 = scmp.lt.s32.totalorder %s19, 1
        %s558 = scalar_select %p557, %s19, 1
        %s559 = smul.addr %s558, 4
        %s560 = smul.addr %s559, 4
        %s561 = scalar_lea.vmem %s7, %s560
      $region60: #{multi_head_attention.2} parent=55 // pred_fallthru
        _
    $region56: #{multi_head_attention.2} parent=5 // pred_fallthru
      _
  $region6: #{multi_head_attention.2} parent=0 // loop_footer
    %s17 = sadd.s32 1, %s13
  $region7: #{multi_head_attention.2} parent=0 // loop_footer_branch
    %12 = sbr.rel target = $region3
  $region8: #{multi_head_attention.2} parent=0 // loop_exit
    _

// kernel: multi_head_attention.3
$region0: #{multi_head_attention.3}
  #allocation0 [shape = 'u32[]', space=smem, size = 0x4, offset = 0x4, fixed_abs, tag = 'smem constant byte address 0x4 - core index']
  #allocation1 [shape = 'u32[144,128]{1,0:T(1,128)}', space=vmem, size = 0x12000, scoped, tag = 'internal scratch']
  %s0 = inlined_call_operand.vmem [shape: f32[2,64,32], index: 0, kind: input, shape index: {}]
  %s1 = inlined_call_operand.vmem [shape: bf16[32,32], index: 1, kind: input, shape index: {}]
  %s2 = inlined_call_operand.vmem [shape: f32[1,32], index: 2, kind: input, shape index: {}]
  %s3 = inlined_call_operand.vmem [shape: bf16[2,16,160], index: 3, kind: input, shape index: {}]
  %s4 = inlined_call_operand.vmem [shape: f32[1,32], index: 4, kind: input, shape index: {}]
  %s5 = inlined_call_operand.vmem [shape: f32[2,64,32], index: 5, kind: output, shape index: {}]
  %s6 = sld [smem:[#allocation0]]
  $region53: #{multi_head_attention.3} parent=0
    _
  %s8 = ssub.s32 1, %s6
  %s9 = scalar_select 0, %s8, %s6
  loop: start=0, step=1, limit=6
  $region2: #{multi_head_attention.3} parent=0 // loop_pre_header
    _
  $region3: #{multi_head_attention.3} parent=0 // loop_header
    %s11 = sphi 0, %s15
    %p12 = scmp.ge.s32.totalorder %s11, 6
    %s18 = sphi 0, %s37
    %s19 = sphi 0, %s33
    %s20 = sphi 0, %s29
    %s21 = sphi 0, %s18
    %s22 = sphi 0, %s19
    %s23 = sphi 0, %s20
    %s24 = sphi 0, %s21
    %s25 = sphi 0, %s22
    %s26 = sphi 0, %s23
    %s42 = sphi 0, %s44
    %s45 = sphi 0, %s42
    %s46 = sphi 0, %s45
    %s62 = sphi 0, %s46
    %s66 = sphi 0, %s66
    %s68 = sphi 0, %s66
    %s69 = sphi 0, %s68
    %s83 = sphi 0, %s69
    %s87 = sphi 0, %s87
    %s89 = sphi 0, %s87
    %s90 = sphi 0, %s89
    %s104 = sphi 0, %s90
    %s112 = sphi 0, %s114
    %s115 = sphi 0, %s112
    %s116 = sphi 0, %s115
    %s132 = sphi 0, %s116
    %s136 = sphi 0, %s136
    %s138 = sphi 0, %s136
    %s139 = sphi 0, %s138
    %s153 = sphi 0, %s139
    %s161 = sphi 0, %s163
    %s164 = sphi 0, %s161
    %s165 = sphi 0, %s164
    %s181 = sphi 0, %s165
  $region4: #{multi_head_attention.3} parent=0 // loop_header_branch
    %14 = sbr.rel (%p12) target = $region8
  $region5: #{multi_head_attention.3} parent=0 // loop_body
    %s16 = ssub.s32 %s11, 1
    %s17 = ssub.s32 %s11, 2
    %s27 = sadd.s32 1, %s20
    %p28 = scmp.ge.s32.totalorder %s27, 1
    %s29 = scalar_select %p28, 0, %s27
    %s30 = sadd.s32 1, %s19
    %s31 = scalar_select %p28, %s30, %s19
    %p32 = scmp.ge.s32.totalorder %s31, 2
    %s33 = scalar_select %p32, 0, %s31
    %s34 = sadd.s32 1, %s18
    %s35 = scalar_select %p32, %s34, %s18
    %p36 = scmp.ge.s32.totalorder %s35, 2
    %s37 = scalar_select %p36, 0, %s35
    %s38 = ssub.s32 %s18, %s37
    %s39 = ssub.s32 %s19, %s33
    %s40 = sor.u32 %s38, %s39
    %p41 = scmp.eq.s32.totalorder %s40, 0
    %s43 = sadd.s32 %s42, 1
    %s44 = scalar_select %p41, %s42, %s43
    %p47 = pneg %p41
    %p48 = scmp.eq.s32.totalorder %s11, 3
    %p49 = por %p47, %p48
    %p50 = scmp.ne.s32.totalorder %s42, %s45
    %p51 = scmp.eq.s32.totalorder %s11, 0
    %p52 = por %p50, %p51
    %p53 = scmp.ne.s32.totalorder %s42, %s45
    %p54 = scmp.eq.s32.totalorder %s16, 3
    %p55 = por %p53, %p54
    %p56 = scmp.ne.s32.totalorder %s45, %s46
    %p57 = scmp.eq.s32.totalorder %s16, 0
    %p58 = por %p56, %p57
    %p59 = scmp.ne.s32.totalorder %s45, %s46
    %p60 = scmp.eq.s32.totalorder %s17, 3
    %p61 = por %p59, %p60
    %p63 = scmp.ne.s32.totalorder %s46, %s62
    %p64 = scmp.eq.s32.totalorder %s17, 0
    %p65 = por %p63, %p64
    %s67 = sadd.s32 %s66, 1
    %p70 = scmp.eq.s32.totalorder %s11, 3
    %p71 = scmp.ne.s32.totalorder %s66, %s68
    %p72 = scmp.eq.s32.totalorder %s11, 0
    %p73 = por %p71, %p72
    %p74 = scmp.ne.s32.totalorder %s66, %s68
    %p75 = scmp.eq.s32.totalorder %s16, 3
    %p76 = por %p74, %p75
    %p77 = scmp.ne.s32.totalorder %s68, %s69
    %p78 = scmp.eq.s32.totalorder %s16, 0
    %p79 = por %p77, %p78
    %p80 = scmp.ne.s32.totalorder %s68, %s69
    %p81 = scmp.eq.s32.totalorder %s17, 3
    %p82 = por %p80, %p81
    %p84 = scmp.ne.s32.totalorder %s69, %s83
    %p85 = scmp.eq.s32.totalorder %s17, 0
    %p86 = por %p84, %p85
    %s88 = sadd.s32 %s87, 1
    %p91 = scmp.eq.s32.totalorder %s11, 3
    %p92 = scmp.ne.s32.totalorder %s87, %s89
    %p93 = scmp.eq.s32.totalorder %s11, 0
    %p94 = por %p92, %p93
    %p95 = scmp.ne.s32.totalorder %s87, %s89
    %p96 = scmp.eq.s32.totalorder %s16, 3
    %p97 = por %p95, %p96
    %p98 = scmp.ne.s32.totalorder %s89, %s90
    %p99 = scmp.eq.s32.totalorder %s16, 0
    %p100 = por %p98, %p99
    %p101 = scmp.ne.s32.totalorder %s89, %s90
    %p102 = scmp.eq.s32.totalorder %s17, 3
    %p103 = por %p101, %p102
    %p105 = scmp.ne.s32.totalorder %s90, %s104
    %p106 = scmp.eq.s32.totalorder %s17, 0
    %p107 = por %p105, %p106
    %s108 = ssub.s32 %s18, %s37
    %s109 = ssub.s32 %s20, %s29
    %s110 = sor.u32 %s108, %s109
    %p111 = scmp.eq.s32.totalorder %s110, 0
    %s113 = sadd.s32 %s112, 1
    %s114 = scalar_select %p111, %s112, %s113
    %p117 = pneg %p111
    %p118 = scmp.eq.s32.totalorder %s11, 3
    %p119 = por %p117, %p118
    %p120 = scmp.ne.s32.totalorder %s112, %s115
    %p121 = scmp.eq.s32.totalorder %s11, 0
    %p122 = por %p120, %p121
    %p123 = scmp.ne.s32.totalorder %s112, %s115
    %p124 = scmp.eq.s32.totalorder %s16, 3
    %p125 = por %p123, %p124
    %p126 = scmp.ne.s32.totalorder %s115, %s116
    %p127 = scmp.eq.s32.totalorder %s16, 0
    %p128 = por %p126, %p127
    %p129 = scmp.ne.s32.totalorder %s115, %s116
    %p130 = scmp.eq.s32.totalorder %s17, 3
    %p131 = por %p129, %p130
    %p133 = scmp.ne.s32.totalorder %s116, %s132
    %p134 = scmp.eq.s32.totalorder %s17, 0
    %p135 = por %p133, %p134
    %s137 = sadd.s32 %s136, 1
    %p140 = scmp.eq.s32.totalorder %s11, 3
    %p141 = scmp.ne.s32.totalorder %s136, %s138
    %p142 = scmp.eq.s32.totalorder %s11, 0
    %p143 = por %p141, %p142
    %p144 = scmp.ne.s32.totalorder %s136, %s138
    %p145 = scmp.eq.s32.totalorder %s16, 3
    %p146 = por %p144, %p145
    %p147 = scmp.ne.s32.totalorder %s138, %s139
    %p148 = scmp.eq.s32.totalorder %s16, 0
    %p149 = por %p147, %p148
    %p150 = scmp.ne.s32.totalorder %s138, %s139
    %p151 = scmp.eq.s32.totalorder %s17, 3
    %p152 = por %p150, %p151
    %p154 = scmp.ne.s32.totalorder %s139, %s153
    %p155 = scmp.eq.s32.totalorder %s17, 0
    %p156 = por %p154, %p155
    %s157 = ssub.s32 %s18, %s37
    %s158 = ssub.s32 %s19, %s33
    %s159 = sor.u32 %s157, %s158
    %p160 = scmp.eq.s32.totalorder %s159, 0
    %s162 = sadd.s32 %s161, 1
    %s163 = scalar_select %p160, %s161, %s162
    %p166 = pneg %p160
    %p167 = scmp.eq.s32.totalorder %s11, 3
    %p168 = por %p166, %p167
    %p169 = scmp.ne.s32.totalorder %s161, %s164
    %p170 = scmp.eq.s32.totalorder %s11, 0
    %p171 = por %p169, %p170
    %p172 = scmp.ne.s32.totalorder %s161, %s164
    %p173 = scmp.eq.s32.totalorder %s16, 3
    %p174 = por %p172, %p173
    %p175 = scmp.ne.s32.totalorder %s164, %s165
    %p176 = scmp.eq.s32.totalorder %s16, 0
    %p177 = por %p175, %p176
    %p178 = scmp.ne.s32.totalorder %s164, %s165
    %p179 = scmp.eq.s32.totalorder %s17, 3
    %p180 = por %p178, %p179
    %p182 = scmp.ne.s32.totalorder %s165, %s181
    %p183 = scmp.eq.s32.totalorder %s17, 0
    %p184 = por %p182, %p183
    %p185 = scmp.le.s32.totalorder 1, %s11
    %p186 = scmp.lt.s32.totalorder %s11, 5
    %p187 = pnand %p185, %p186
    %p188 = pneg %p187
    // Predicated region
    $region9: #{multi_head_attention.3} parent=5 // pred_check
      _
    $region10: #{multi_head_attention.3} parent=5 // pred_check_branch
      %190 = sbr.rel (%p187) target = $region12
    $region11: #{multi_head_attention.3} parent=5 // pred_region
      %s191 = ssub.s32 %s11, 1
      // Predicated region
      $region13: #{multi_head_attention.3} parent=11 // pred_check
        %p192 = pneg %p79
      $region14: #{multi_head_attention.3} parent=11 // pred_check_branch
        %194 = sbr.rel (%p192) target = $region16
      $region15: #{multi_head_attention.3} parent=11 // pred_region
        _
      $region16: #{multi_head_attention.3} parent=11 // pred_fallthru
        _
      // Predicated region
      $region17: #{multi_head_attention.3} parent=11 // pred_check
        %p195 = pneg %p100
      $region18: #{multi_head_attention.3} parent=11 // pred_check_branch
        %197 = sbr.rel (%p195) target = $region20
      $region19: #{multi_head_attention.3} parent=11 // pred_region
        _
      $region20: #{multi_head_attention.3} parent=11 // pred_fallthru
        _
      // Predicated region
      $region21: #{multi_head_attention.3} parent=11 // pred_check
        %p198 = pneg %p149
      $region22: #{multi_head_attention.3} parent=11 // pred_check_branch
        %200 = sbr.rel (%p198) target = $region24
      $region23: #{multi_head_attention.3} parent=11 // pred_region
        _
      $region24: #{multi_head_attention.3} parent=11 // pred_fallthru
        _
    $region12: #{multi_head_attention.3} parent=5 // pred_fallthru
      _
    %p201 = scmp.lt.s32.totalorder %s11, 4
    // Predicated region
    $region25: #{multi_head_attention.3} parent=5 // pred_check
      %p202 = pneg %p201
    $region26: #{multi_head_attention.3} parent=5 // pred_check_branch
      %204 = sbr.rel (%p202) target = $region28
    $region27: #{multi_head_attention.3} parent=5 // pred_region
      // Predicated region
      $region29: #{multi_head_attention.3} parent=27 // pred_check
        %p205 = pneg %p52
      $region30: #{multi_head_attention.3} parent=27 // pred_check_branch
        %207 = sbr.rel (%p205) target = $region32
      $region31: #{multi_head_attention.3} parent=27 // pred_region
        %s208 = smul.u32 4, %s19
        %p209 = scmp.lt.s32.totalorder %s18, 1
        %s210 = scalar_select %p209, %s18, 1
        %p211 = scmp.lt.s32.totalorder %s208, 7
        %s212 = scalar_select %p211, %s208, 7
        %s213 = smul.addr %s210, 8
        %s214 = sadd.s32 %s212, %s213
        %s215 = smul.addr %s214, 8
        %s216 = scalar_lea.vmem %s0, %s215
        %s217 = smul.u32 4, %s19
      $region32: #{multi_head_attention.3} parent=27 // pred_fallthru
        _
      // Predicated region
      $region33: #{multi_head_attention.3} parent=27 // pred_check
        %p218 = pneg %p122
      $region34: #{multi_head_attention.3} parent=27 // pred_check_branch
        %220 = sbr.rel (%p218) target = $region36
      $region35: #{multi_head_attention.3} parent=27 // pred_region
        %s221 = smul.u32 2, %s20
        %p222 = scmp.lt.s32.totalorder %s18, 1
        %s223 = scalar_select %p222, %s18, 1
        %p224 = scmp.lt.s32.totalorder %s221, 1
        %s225 = scalar_select %p224, %s221, 1
        %s226 = smul.addr %s225, 2
        %s227 = smul.addr %s223, 4
        %s228 = sadd.s32 %s226, %s227
        %s229 = smul.addr %s228, 4
        %s230 = scalar_lea.vmem %s3, %s229
        %s231 = smul.u32 2, %s20
      $region36: #{multi_head_attention.3} parent=27 // pred_fallthru
        _
    $region28: #{multi_head_attention.3} parent=5 // pred_fallthru
      _
    %p232 = scmp.le.s32.totalorder 1, %s11
    %p233 = scmp.lt.s32.totalorder %s11, 5
    %p234 = pnand %p232, %p233
    %p235 = pneg %p234
    // Predicated region
    $region37: #{multi_head_attention.3} parent=5 // pred_check
      _
    $region38: #{multi_head_attention.3} parent=5 // pred_check_branch
      %237 = sbr.rel (%p234) target = $region40
    $region39: #{multi_head_attention.3} parent=5 // pred_region
      %s238 = ssub.s32 %s11, 1
      %s239 = smul.u32 4, %s22
      %p240 = scmp.lt.s32.totalorder %s21, 1
      %s241 = scalar_select %p240, %s21, 1
      %p242 = scmp.lt.s32.totalorder %s239, 7
      %s243 = scalar_select %p242, %s239, 7
      %s244 = smul.addr %s241, 8
      %s245 = sadd.s32 %s243, %s244
      %s246 = smul.addr %s245, 8
      %s247 = scalar_lea.vmem %s0, %s246
      %p248 = pneg %p58
      %p249 = pneg %p55
      %p250 = pneg %p79
      %p251 = pneg %p76
      %p252 = pneg %p100
      %p253 = pneg %p97
      %s254 = smul.u32 2, %s23
      %p255 = scmp.lt.s32.totalorder %s21, 1
      %s256 = scalar_select %p255, %s21, 1
      %p257 = scmp.lt.s32.totalorder %s254, 1
      %s258 = scalar_select %p257, %s254, 1
      %s259 = smul.addr %s258, 2
      %s260 = smul.addr %s256, 4
      %s261 = sadd.s32 %s259, %s260
      %s262 = smul.addr %s261, 4
      %s263 = scalar_lea.vmem %s3, %s262
      %p264 = pneg %p128
      %p265 = pneg %p125
      %p266 = pneg %p149
      %p267 = pneg %p146
      %p268 = pneg %p177
      %p269 = pneg %p174
      %s270 = smul.u32 4, %s22
      %p271 = scmp.lt.s32.totalorder %s21, 1
      %s272 = scalar_select %p271, %s21, 1
      %p273 = scmp.lt.s32.totalorder %s270, 7
      %s274 = scalar_select %p273, %s270, 7
      %s275 = smul.addr %s272, 8
      %s276 = sadd.s32 %s274, %s275
      %s277 = smul.addr %s276, 8
      %s278 = scalar_lea.vmem %s5, %s277
      %s279 = smul.u32 4, %s22
      %p280 = scmp.lt.s32.totalorder %s21, 1
      %s281 = scalar_select %p280, %s21, 1
      %p282 = scmp.lt.s32.totalorder %s279, 7
      %s283 = scalar_select %p282, %s279, 7
      %s284 = smul.addr %s281, 8
      %s285 = sadd.s32 %s283, %s284
      %s286 = smul.addr %s285, 8
      %s287 = scalar_lea.vmem %s0, %s286
      %s288 = smul.u32 4, %s22
      %s289 = smul.u32 2, %s23
      %p290 = scmp.lt.s32.totalorder %s21, 1
      %s291 = scalar_select %p290, %s21, 1
      %p292 = scmp.lt.s32.totalorder %s289, 1
      %s293 = scalar_select %p292, %s289, 1
      %s294 = smul.addr %s293, 2
      %s295 = smul.addr %s291, 4
      %s296 = sadd.s32 %s294, %s295
      %s297 = smul.addr %s296, 4
      %s298 = scalar_lea.vmem %s3, %s297
      %s299 = smul.u32 2, %s23
      %s300 = smul.u32 4, %s22
      %p301 = scmp.lt.s32.totalorder %s21, 1
      %s302 = scalar_select %p301, %s21, 1
      %p303 = scmp.lt.s32.totalorder %s300, 7
      %s304 = scalar_select %p303, %s300, 7
      %s305 = smul.addr %s302, 8
      %s306 = sadd.s32 %s304, %s305
      %s307 = smul.addr %s306, 8
      %s308 = scalar_lea.vmem %s5, %s307
      %s309 = smul.u32 4, %s22
      %v311 = vld [vmem:[%s287] sm:$0xff]
      %v312 = vld [vmem:[%s287 + $0x8] sm:$0xff]
      %v313 = vld [vmem:[%s287 + $0x10] sm:$0xff]
      %v314 = vld [vmem:[%s287 + $0x18] sm:$0xff]
      %v315 = vpack.c.bf16 %v312, %v311
      %v316 = vpack.c.bf16 %v314, %v313
      %v317 = vld [vmem:[%s1] sm:$0xf]
      %v318 = vld [vmem:[%s1 + $0x4] sm:$0xf]
      %v319 = vld [vmem:[%s1 + $0x8] sm:$0xf]
      %v320 = vld [vmem:[%s1 + $0xc] sm:$0xf]
      %v321 = vld [vmem:[%s2] sm:$0x1]
      %v323 = vlaneseq
      %v324 = vshrl.u32 %v323, 7
      %v325 = vsub.s32 0, %v324
      %v326 = vrot.slane %v321, %v325
      %v332 = vunpack.c.l.b16 %v317
      %v333 = vunpack.c.l.b16 %v318
      %v334 = vunpack.c.l.b16 %v319
      %v335 = vunpack.c.l.b16 %v320
      %v336 = vpack.c.b16 %v333, %v332
      %v337 = vpack.c.b16 %v335, %v334
      %vm340 = vcmask 261120
      %v342 = vsel %vm340, %v315, 0
      %v345 = vsel %vm340, %v316, 0
      %347 = vmatprep.subr.bf16.mxu0 0
      %348 = vmatpush1.bf16.msra.mxu0 %v336
      %349 = vmatprep.subr.bf16.mxu0 0
      %350 = vmatpush1.bf16.msra.mxu0 %v337
      %351 = vmatprep.subr.bf16.mxu0 0
      %352 = vmatpush1.bf16.msra.mxu0 0
      %353 = vmatprep.subr.bf16.mxu0 0
      %354 = vmatpush1.bf16.msra.mxu0 0
      %355 = vmatprep.subr.bf16.mxu0 0
      %356 = vmatpush1.bf16.msra.mxu0 0
      %357 = vmatprep.subr.bf16.mxu0 0
      %358 = vmatpush1.bf16.msra.mxu0 0
      %359 = vmatprep.subr.bf16.mxu0 0
      %360 = vmatpush1.bf16.msra.mxu0 0
      %361 = vmatprep.subr.bf16.mxu0 0
      %362 = vmatpush1.bf16.msra.mxu0 0
      %363 = vmatprep.subr.bf16.mxu0 0
      %364 = vmatpush1.bf16.msra.mxu0 0
      %365 = vmatprep.subr.bf16.mxu0 0
      %366 = vmatpush1.bf16.msra.mxu0 0
      %367 = vmatprep.subr.bf16.mxu0 0
      %368 = vmatpush1.bf16.msra.mxu0 0
      %369 = vmatprep.subr.bf16.mxu0 0
      %370 = vmatpush1.bf16.msra.mxu0 0
      %371 = vmatprep.subr.bf16.mxu0 0
      %372 = vmatpush1.bf16.msra.mxu0 0
      %373 = vmatprep.subr.bf16.mxu0 0
      %374 = vmatpush1.bf16.msra.mxu0 0
      %375 = vmatprep.subr.bf16.mxu0 0
      %376 = vmatpush1.bf16.msra.mxu0 0
      %377 = vmatprep.subr.bf16.mxu0 0
      %378 = vmatpush1.bf16.msra.mxu0 0
      %379 = vmatprep.mubr.bf16.mxu0 0
      %380 = vmatmul.mubr.bf16.gmra.mrb[0].mxu0 %v342
      %v381 = vpop.f32.mrb[0].mxu0
      %v382 = vadd.f32 %v326, %v381
      %v383 = vpop.f32.mrb[0].mxu0
      %v384 = vpop.f32.mrb[0].mxu0
      %v385 = vadd.f32 %v326, %v384
      %v386 = vpop.f32.mrb[0].mxu0
      %387 = vmatprep.mubr.bf16.mxu0 0
      %388 = vmatmul.mubr.bf16.gmra.mrb[0].mxu0 %v345
      %v389 = vpop.f32.mrb[0].mxu0
      %v390 = vadd.f32 %v326, %v389
      %v391 = vpop.f32.mrb[0].mxu0
      %v392 = vpop.f32.mrb[0].mxu0
      %v393 = vadd.f32 %v326, %v392
      %v394 = vpop.f32.mrb[0].mxu0
      %395 = vdwg.mxu0
      %v396 = vmul.f32 %v382, 0.35355338
      %v397 = vmul.f32 %v385, 0.35355338
      %v398 = vmul.f32 %v390, 0.35355338
      %v399 = vmul.f32 %v393, 0.35355338
      %v400 = vpack.c.bf16 %v397, %v396
      %v401 = vpack.c.bf16 %v399, %v398
      %v402 = vld [vmem:[%s298] sm:$0xff]
      %v403 = vld [vmem:[%s298 + $0x8] sm:$0xff]
      %v406 = vunpack.c.l.b16 %v402
      %v407 = vunpack.c.l.b16 %v403
      %v408 = vpack.c.b16 %v407, %v406
      %vm409 = vcmask 64512
      %v411 = vsel %vm409, %v400, 0
      %v414 = vsel %vm409, %v401, 0
      %v417 = vsel %vm409, %v408, 0
      %419 = vmatprep.subr.bf16.mxu0 0
      %420 = vmatpush1.bf16.xpose.msra.mxu0 %v417
      %421 = vmatprep.subr.bf16.mxu0 0
      %422 = vmatpush1.bf16.xpose.msra.mxu0 0
      %423 = vmatprep.subr.bf16.mxu0 0
      %424 = vmatpush1.bf16.xpose.msra.mxu0 0
      %425 = vmatprep.subr.bf16.mxu0 0
      %426 = vmatpush1.bf16.xpose.msra.mxu0 0
      %427 = vmatprep.subr.bf16.mxu0 0
      %428 = vmatpush1.bf16.xpose.msra.mxu0 0
      %429 = vmatprep.subr.bf16.mxu0 0
      %430 = vmatpush1.bf16.xpose.msra.mxu0 0
      %431 = vmatprep.subr.bf16.mxu0 0
      %432 = vmatpush1.bf16.xpose.msra.mxu0 0
      %433 = vmatprep.subr.bf16.mxu0 0
      %434 = vmatpush1.bf16.xpose.msra.mxu0 0
      %435 = vmatprep.subr.bf16.mxu0 0
      %436 = vmatpush1.bf16.xpose.msra.mxu0 0
      %437 = vmatprep.subr.bf16.mxu0 0
      %438 = vmatpush1.bf16.xpose.msra.mxu0 0
      %439 = vmatprep.subr.bf16.mxu0 0
      %440 = vmatpush1.bf16.xpose.msra.mxu0 0
      %441 = vmatprep.subr.bf16.mxu0 0
      %442 = vmatpush1.bf16.xpose.msra.mxu0 0
      %443 = vmatprep.subr.bf16.mxu0 0
      %444 = vmatpush1.bf16.xpose.msra.mxu0 0
      %445 = vmatprep.subr.bf16.mxu0 0
      %446 = vmatpush1.bf16.xpose.msra.mxu0 0
      %447 = vmatprep.subr.bf16.mxu0 0
      %448 = vmatpush1.bf16.xpose.msra.mxu0 0
      %449 = vmatprep.subr.bf16.mxu0 0
      %450 = vmatpush1.bf16.xpose.msra.mxu0 0
      %451 = vmatprep.mubr.bf16.mxu0 0
      %452 = vmatmul.mubr.bf16.gmra.mrb[0].mxu0 %v411
      %v453 = vpop.f32.mrb[0].mxu0
      %v454 = vadd.f32 0.0, %v453
      %v455 = vpop.f32.mrb[0].mxu0
      %v456 = vpop.f32.mrb[0].mxu0
      %v457 = vadd.f32 0.0, %v456
      %v458 = vpop.f32.mrb[0].mxu0
      %459 = vmatprep.mubr.bf16.mxu0 0
      %460 = vmatmul.mubr.bf16.gmra.mrb[0].mxu0 %v414
      %v461 = vpop.f32.mrb[0].mxu0
      %v462 = vadd.f32 0.0, %v461
      %v463 = vpop.f32.mrb[0].mxu0
      %v464 = vpop.f32.mrb[0].mxu0
      %v465 = vadd.f32 0.0, %v464
      %v466 = vpop.f32.mrb[0].mxu0
      %467 = vdwg.mxu0
      %vm468 = vcmask 130048
      %v469 = vsel %vm468, %v454, -inf
      %470 = vmax.xlane.f32.xlu0 %v469
      %v471 = vpop.xlane.xlu0 %470
      %v472 = vsel %vm468, %v457, -inf
      %473 = vmax.xlane.f32.xlu0 %v472
      %v474 = vpop.xlane.xlu0 %473
      %v475 = vsel %vm468, %v462, -inf
      %476 = vmax.xlane.f32.xlu0 %v475
      %v477 = vpop.xlane.xlu0 %476
      %v478 = vsel %vm468, %v465, -inf
      %479 = vmax.xlane.f32.xlu0 %v478
      %v480 = vpop.xlane.xlu0 %479
      %v481 = vsub.f32 %v454, %v471
      %v482 = vsub.f32 %v457, %v474
      %v483 = vsub.f32 %v462, %v477
      %v484 = vsub.f32 %v465, %v480
      %v485 = vmul.f32 %v481, 1.442695
      %v486 = vpow.pop %v485
      %v487 = vmul.f32 %v482, 1.442695
      %v488 = vpow.pop %v487
      %v489 = vmul.f32 %v483, 1.442695
      %v490 = vpow.pop %v489
      %v491 = vmul.f32 %v484, 1.442695
      %v492 = vpow.pop %v491
      %v493 = vsel %vm468, %v486, 0.0
      %494 = vadd.xlane.f32.xlu0 %v493
      %v495 = vpop.xlane.xlu0 %494
      %v496 = vsel %vm468, %v488, 0.0
      %497 = vadd.xlane.f32.xlu0 %v496
      %v498 = vpop.xlane.xlu0 %497
      %v499 = vsel %vm468, %v490, 0.0
      %500 = vadd.xlane.f32.xlu0 %v499
      %v501 = vpop.xlane.xlu0 %500
      %v502 = vsel %vm468, %v492, 0.0
      %503 = vadd.xlane.f32.xlu0 %v502
      %v504 = vpop.xlane.xlu0 %503
      %v505 = vrcp.pop %v495
      %v506 = vrcp.pop %v498
      %v507 = vrcp.pop %v501
      %v508 = vrcp.pop %v504
      %v509 = vpack.c.bf16 %v488, %v486
      %v510 = vpack.c.bf16 %v492, %v490
      %511 = vrot.lane.b32.xlu0 %v408, 96
      %v512 = vpop.permute.xlu0 %511
      %v515 = vsel %vm468, %v509, 0
      %v518 = vsel %vm468, %v510, 0
      %520 = vmatprep.subr.bf16.mxu0 0
      %521 = vmatpush1.bf16.msra.mxu0 %v512
      %522 = vmatprep.subr.bf16.mxu0 0
      %523 = vmatpush1.bf16.msra.mxu0 0
      %524 = vmatprep.subr.bf16.mxu0 0
      %525 = vmatpush1.bf16.msra.mxu0 0
      %526 = vmatprep.subr.bf16.mxu0 0
      %527 = vmatpush1.bf16.msra.mxu0 0
      %528 = vmatprep.subr.bf16.mxu0 0
      %529 = vmatpush1.bf16.msra.mxu0 0
      %530 = vmatprep.subr.bf16.mxu0 0
      %531 = vmatpush1.bf16.msra.mxu0 0
      %532 = vmatprep.subr.bf16.mxu0 0
      %533 = vmatpush1.bf16.msra.mxu0 0
      %534 = vmatprep.subr.bf16.mxu0 0
      %535 = vmatpush1.bf16.msra.mxu0 0
      %536 = vmatprep.subr.bf16.mxu0 0
      %537 = vmatpush1.bf16.msra.mxu0 0
      %538 = vmatprep.subr.bf16.mxu0 0
      %539 = vmatpush1.bf16.msra.mxu0 0
      %540 = vmatprep.subr.bf16.mxu0 0
      %541 = vmatpush1.bf16.msra.mxu0 0
      %542 = vmatprep.subr.bf16.mxu0 0
      %543 = vmatpush1.bf16.msra.mxu0 0
      %544 = vmatprep.subr.bf16.mxu0 0
      %545 = vmatpush1.bf16.msra.mxu0 0
      %546 = vmatprep.subr.bf16.mxu0 0
      %547 = vmatpush1.bf16.msra.mxu0 0
      %548 = vmatprep.subr.bf16.mxu0 0
      %549 = vmatpush1.bf16.msra.mxu0 0
      %550 = vmatprep.subr.bf16.mxu0 0
      %551 = vmatpush1.bf16.msra.mxu0 0
      %552 = vmatprep.mubr.bf16.mxu0 0
      %553 = vmatmul.mubr.bf16.gmra.mrb[0].mxu0 %v515
      %v554 = vpop.f32.mrb[0].mxu0
      %v555 = vadd.f32 0.0, %v554
      %v556 = vpop.f32.mrb[0].mxu0
      %v557 = vpop.f32.mrb[0].mxu0
      %v558 = vadd.f32 0.0, %v557
      %v559 = vpop.f32.mrb[0].mxu0
      %560 = vmatprep.mubr.bf16.mxu0 0
      %561 = vmatmul.mubr.bf16.gmra.mrb[0].mxu0 %v518
      %v562 = vpop.f32.mrb[0].mxu0
      %v563 = vadd.f32 0.0, %v562
      %v564 = vpop.f32.mrb[0].mxu0
      %v565 = vpop.f32.mrb[0].mxu0
      %v566 = vadd.f32 0.0, %v565
      %v567 = vpop.f32.mrb[0].mxu0
      %568 = vdwg.mxu0
      %v569 = vmul.f32 %v555, %v505
      %v570 = vmul.f32 %v558, %v506
      %v571 = vmul.f32 %v563, %v507
      %v572 = vmul.f32 %v566, %v508
      %575 = vrot.lane.b32.xlu0 %v400, 120
      %v576 = vpop.permute.xlu0 %575
      %577 = vrot.lane.b32.xlu0 %v401, 120
      %v578 = vpop.permute.xlu0 %577
      %579 = vrot.lane.b32.xlu0 %v408, 120
      %v580 = vpop.permute.xlu0 %579
      %v582 = vsel %vm409, %v576, 0
      %v585 = vsel %vm409, %v578, 0
      %v588 = vsel %vm409, %v580, 0
      %590 = vmatprep.subr.bf16.mxu0 0
      %591 = vmatpush1.bf16.xpose.msra.mxu0 %v588
      %592 = vmatprep.subr.bf16.mxu0 0
      %593 = vmatpush1.bf16.xpose.msra.mxu0 0
      %594 = vmatprep.subr.bf16.mxu0 0
      %595 = vmatpush1.bf16.xpose.msra.mxu0 0
      %596 = vmatprep.subr.bf16.mxu0 0
      %597 = vmatpush1.bf16.xpose.msra.mxu0 0
      %598 = vmatprep.subr.bf16.mxu0 0
      %599 = vmatpush1.bf16.xpose.msra.mxu0 0
      %600 = vmatprep.subr.bf16.mxu0 0
      %601 = vmatpush1.bf16.xpose.msra.mxu0 0
      %602 = vmatprep.subr.bf16.mxu0 0
      %603 = vmatpush1.bf16.xpose.msra.mxu0 0
      %604 = vmatprep.subr.bf16.mxu0 0
      %605 = vmatpush1.bf16.xpose.msra.mxu0 0
      %606 = vmatprep.subr.bf16.mxu0 0
      %607 = vmatpush1.bf16.xpose.msra.mxu0 0
      %608 = vmatprep.subr.bf16.mxu0 0
      %609 = vmatpush1.bf16.xpose.msra.mxu0 0
      %610 = vmatprep.subr.bf16.mxu0 0
      %611 = vmatpush1.bf16.xpose.msra.mxu0 0
      %612 = vmatprep.subr.bf16.mxu0 0
      %613 = vmatpush1.bf16.xpose.msra.mxu0 0
      %614 = vmatprep.subr.bf16.mxu0 0
      %615 = vmatpush1.bf16.xpose.msra.mxu0 0
      %616 = vmatprep.subr.bf16.mxu0 0
      %617 = vmatpush1.bf16.xpose.msra.mxu0 0
      %618 = vmatprep.subr.bf16.mxu0 0
      %619 = vmatpush1.bf16.xpose.msra.mxu0 0
      %620 = vmatprep.subr.bf16.mxu0 0
      %621 = vmatpush1.bf16.xpose.msra.mxu0 0
      %622 = vmatprep.mubr.bf16.mxu0 0
      %623 = vmatmul.mubr.bf16.gmra.mrb[0].mxu0 %v582
      %v624 = vpop.f32.mrb[0].mxu0
      %v625 = vadd.f32 0.0, %v624
      %v626 = vpop.f32.mrb[0].mxu0
      %v627 = vpop.f32.mrb[0].mxu0
      %v628 = vadd.f32 0.0, %v627
      %v629 = vpop.f32.mrb[0].mxu0
      %630 = vmatprep.mubr.bf16.mxu0 0
      %631 = vmatmul.mubr.bf16.gmra.mrb[0].mxu0 %v585
      %v632 = vpop.f32.mrb[0].mxu0
      %v633 = vadd.f32 0.0, %v632
      %v634 = vpop.f32.mrb[0].mxu0
      %v635 = vpop.f32.mrb[0].mxu0
      %v636 = vadd.f32 0.0, %v635
      %v637 = vpop.f32.mrb[0].mxu0
      %638 = vdwg.mxu0
      %v639 = vsel %vm468, %v625, -inf
      %640 = vmax.xlane.f32.xlu0 %v639
      %v641 = vpop.xlane.xlu0 %640
      %v642 = vsel %vm468, %v628, -inf
      %643 = vmax.xlane.f32.xlu0 %v642
      %v644 = vpop.xlane.xlu0 %643
      %v645 = vsel %vm468, %v633, -inf
      %646 = vmax.xlane.f32.xlu0 %v645
      %v647 = vpop.xlane.xlu0 %646
      %v648 = vsel %vm468, %v636, -inf
      %649 = vmax.xlane.f32.xlu0 %v648
      %v650 = vpop.xlane.xlu0 %649
      %v651 = vsub.f32 %v625, %v641
      %v652 = vsub.f32 %v628, %v644
      %v653 = vsub.f32 %v633, %v647
      %v654 = vsub.f32 %v636, %v650
      %v655 = vmul.f32 %v651, 1.442695
      %v656 = vpow.pop %v655
      %v657 = vmul.f32 %v652, 1.442695
      %v658 = vpow.pop %v657
      %v659 = vmul.f32 %v653, 1.442695
      %v660 = vpow.pop %v659
      %v661 = vmul.f32 %v654, 1.442695
      %v662 = vpow.pop %v661
      %v663 = vsel %vm468, %v656, 0.0
      %664 = vadd.xlane.f32.xlu0 %v663
      %v665 = vpop.xlane.xlu0 %664
      %v666 = vsel %vm468, %v658, 0.0
      %667 = vadd.xlane.f32.xlu0 %v666
      %v668 = vpop.xlane.xlu0 %667
      %v669 = vsel %vm468, %v660, 0.0
      %670 = vadd.xlane.f32.xlu0 %v669
      %v671 = vpop.xlane.xlu0 %670
      %v672 = vsel %vm468, %v662, 0.0
      %673 = vadd.xlane.f32.xlu0 %v672
      %v674 = vpop.xlane.xlu0 %673
      %v675 = vrcp.pop %v665
      %v676 = vrcp.pop %v668
      %v677 = vrcp.pop %v671
      %v678 = vrcp.pop %v674
      %v679 = vpack.c.bf16 %v658, %v656
      %v680 = vpack.c.bf16 %v662, %v660
      %681 = vrot.lane.b32.xlu0 %v408, 64
      %v682 = vpop.permute.xlu0 %681
      %v685 = vsel %vm468, %v679, 0
      %v688 = vsel %vm468, %v680, 0
      %690 = vmatprep.subr.bf16.mxu0 0
      %691 = vmatpush1.bf16.msra.mxu0 %v682
      %692 = vmatprep.subr.bf16.mxu0 0
      %693 = vmatpush1.bf16.msra.mxu0 0
      %694 = vmatprep.subr.bf16.mxu0 0
      %695 = vmatpush1.bf16.msra.mxu0 0
      %696 = vmatprep.subr.bf16.mxu0 0
      %697 = vmatpush1.bf16.msra.mxu0 0
      %698 = vmatprep.subr.bf16.mxu0 0
      %699 = vmatpush1.bf16.msra.mxu0 0
      %700 = vmatprep.subr.bf16.mxu0 0
      %701 = vmatpush1.bf16.msra.mxu0 0
      %702 = vmatprep.subr.bf16.mxu0 0
      %703 = vmatpush1.bf16.msra.mxu0 0
      %704 = vmatprep.subr.bf16.mxu0 0
      %705 = vmatpush1.bf16.msra.mxu0 0
      %706 = vmatprep.subr.bf16.mxu0 0
      %707 = vmatpush1.bf16.msra.mxu0 0
      %708 = vmatprep.subr.bf16.mxu0 0
      %709 = vmatpush1.bf16.msra.mxu0 0
      %710 = vmatprep.subr.bf16.mxu0 0
      %711 = vmatpush1.bf16.msra.mxu0 0
      %712 = vmatprep.subr.bf16.mxu0 0
      %713 = vmatpush1.bf16.msra.mxu0 0
      %714 = vmatprep.subr.bf16.mxu0 0
      %715 = vmatpush1.bf16.msra.mxu0 0
      %716 = vmatprep.subr.bf16.mxu0 0
      %717 = vmatpush1.bf16.msra.mxu0 0
      %718 = vmatprep.subr.bf16.mxu0 0
      %719 = vmatpush1.bf16.msra.mxu0 0
      %720 = vmatprep.subr.bf16.mxu0 0
      %721 = vmatpush1.bf16.msra.mxu0 0
      %722 = vmatprep.mubr.bf16.mxu0 0
      %723 = vmatmul.mubr.bf16.gmra.mrb[0].mxu0 %v685
      %v724 = vpop.f32.mrb[0].mxu0
      %v725 = vadd.f32 0.0, %v724
      %v726 = vpop.f32.mrb[0].mxu0
      %v727 = vpop.f32.mrb[0].mxu0
      %v728 = vadd.f32 0.0, %v727
      %v729 = vpop.f32.mrb[0].mxu0
      %730 = vmatprep.mubr.bf16.mxu0 0
      %731 = vmatmul.mubr.bf16.gmra.mrb[0].mxu0 %v688
      %v732 = vpop.f32.mrb[0].mxu0
      %v733 = vadd.f32 0.0, %v732
      %v734 = vpop.f32.mrb[0].mxu0
      %v735 = vpop.f32.mrb[0].mxu0
      %v736 = vadd.f32 0.0, %v735
      %v737 = vpop.f32.mrb[0].mxu0
      %738 = vdwg.mxu0
      %v739 = vmul.f32 %v725, %v675
      %v740 = vmul.f32 %v728, %v676
      %v741 = vmul.f32 %v733, %v677
      %v742 = vmul.f32 %v736, %v678
      %v743 = vadd.f32 %v569, %v739
      %v744 = vadd.f32 %v570, %v740
      %v745 = vadd.f32 %v571, %v741
      %v746 = vadd.f32 %v572, %v742
      %747 = vrot.lane.b32.xlu0 %v400, 112
      %v748 = vpop.permute.xlu0 %747
      %749 = vrot.lane.b32.xlu0 %v401, 112
      %v750 = vpop.permute.xlu0 %749
      %751 = vrot.lane.b32.xlu0 %v408, 112
      %v752 = vpop.permute.xlu0 %751
      %v754 = vsel %vm409, %v748, 0
      %v757 = vsel %vm409, %v750, 0
      %v760 = vsel %vm409, %v752, 0
      %762 = vmatprep.subr.bf16.mxu0 0
      %763 = vmatpush1.bf16.xpose.msra.mxu0 %v760
      %764 = vmatprep.subr.bf16.mxu0 0
      %765 = vmatpush1.bf16.xpose.msra.mxu0 0
      %766 = vmatprep.subr.bf16.mxu0 0
      %767 = vmatpush1.bf16.xpose.msra.mxu0 0
      %768 = vmatprep.subr.bf16.mxu0 0
      %769 = vmatpush1.bf16.xpose.msra.mxu0 0
      %770 = vmatprep.subr.bf16.mxu0 0
      %771 = vmatpush1.bf16.xpose.msra.mxu0 0
      %772 = vmatprep.subr.bf16.mxu0 0
      %773 = vmatpush1.bf16.xpose.msra.mxu0 0
      %774 = vmatprep.subr.bf16.mxu0 0
      %775 = vmatpush1.bf16.xpose.msra.mxu0 0
      %776 = vmatprep.subr.bf16.mxu0 0
      %777 = vmatpush1.bf16.xpose.msra.mxu0 0
      %778 = vmatprep.subr.bf16.mxu0 0
      %779 = vmatpush1.bf16.xpose.msra.mxu0 0
      %780 = vmatprep.subr.bf16.mxu0 0
      %781 = vmatpush1.bf16.xpose.msra.mxu0 0
      %782 = vmatprep.subr.bf16.mxu0 0
      %783 = vmatpush1.bf16.xpose.msra.mxu0 0
      %784 = vmatprep.subr.bf16.mxu0 0
      %785 = vmatpush1.bf16.xpose.msra.mxu0 0
      %786 = vmatprep.subr.bf16.mxu0 0
      %787 = vmatpush1.bf16.xpose.msra.mxu0 0
      %788 = vmatprep.subr.bf16.mxu0 0
      %789 = vmatpush1.bf16.xpose.msra.mxu0 0
      %790 = vmatprep.subr.bf16.mxu0 0
      %791 = vmatpush1.bf16.xpose.msra.mxu0 0
      %792 = vmatprep.subr.bf16.mxu0 0
      %793 = vmatpush1.bf16.xpose.msra.mxu0 0
      %794 = vmatprep.mubr.bf16.mxu0 0
      %795 = vmatmul.mubr.bf16.gmra.mrb[0].mxu0 %v754
      %v796 = vpop.f32.mrb[0].mxu0
      %v797 = vadd.f32 0.0, %v796
      %v798 = vpop.f32.mrb[0].mxu0
      %v799 = vpop.f32.mrb[0].mxu0
      %v800 = vadd.f32 0.0, %v799
      %v801 = vpop.f32.mrb[0].mxu0
      %802 = vmatprep.mubr.bf16.mxu0 0
      %803 = vmatmul.mubr.bf16.gmra.mrb[0].mxu0 %v757
      %v804 = vpop.f32.mrb[0].mxu0
      %v805 = vadd.f32 0.0, %v804
      %v806 = vpop.f32.mrb[0].mxu0
      %v807 = vpop.f32.mrb[0].mxu0
      %v808 = vadd.f32 0.0, %v807
      %v809 = vpop.f32.mrb[0].mxu0
      %810 = vdwg.mxu0
      %v811 = vsel %vm468, %v797, -inf
      %812 = vmax.xlane.f32.xlu0 %v811
      %v813 = vpop.xlane.xlu0 %812
      %v814 = vsel %vm468, %v800, -inf
      %815 = vmax.xlane.f32.xlu0 %v814
      %v816 = vpop.xlane.xlu0 %815
      %v817 = vsel %vm468, %v805, -inf
      %818 = vmax.xlane.f32.xlu0 %v817
      %v819 = vpop.xlane.xlu0 %818
      %v820 = vsel %vm468, %v808, -inf
      %821 = vmax.xlane.f32.xlu0 %v820
      %v822 = vpop.xlane.xlu0 %821
      %v823 = vsub.f32 %v797, %v813
      %v824 = vsub.f32 %v800, %v816
      %v825 = vsub.f32 %v805, %v819
      %v826 = vsub.f32 %v808, %v822
      %v827 = vmul.f32 %v823, 1.442695
      %v828 = vpow.pop %v827
      %v829 = vmul.f32 %v824, 1.442695
      %v830 = vpow.pop %v829
      %v831 = vmul.f32 %v825, 1.442695
      %v832 = vpow.pop %v831
      %v833 = vmul.f32 %v826, 1.442695
      %v834 = vpow.pop %v833
      %v835 = vsel %vm468, %v828, 0.0
      %836 = vadd.xlane.f32.xlu0 %v835
      %v837 = vpop.xlane.xlu0 %836
      %v838 = vsel %vm468, %v830, 0.0
      %839 = vadd.xlane.f32.xlu0 %v838
      %v840 = vpop.xlane.xlu0 %839
      %v841 = vsel %vm468, %v832, 0.0
      %842 = vadd.xlane.f32.xlu0 %v841
      %v843 = vpop.xlane.xlu0 %842
      %v844 = vsel %vm468, %v834, 0.0
      %845 = vadd.xlane.f32.xlu0 %v844
      %v846 = vpop.xlane.xlu0 %845
      %v847 = vrcp.pop %v837
      %v848 = vrcp.pop %v840
      %v849 = vrcp.pop %v843
      %v850 = vrcp.pop %v846
      %v851 = vpack.c.bf16 %v830, %v828
      %v852 = vpack.c.bf16 %v834, %v832
      %853 = vrot.lane.b32.xlu0 %v408, 32
      %v854 = vpop.permute.xlu0 %853
      %v857 = vsel %vm468, %v851, 0
      %v860 = vsel %vm468, %v852, 0
      %862 = vmatprep.subr.bf16.mxu0 0
      %863 = vmatpush1.bf16.msra.mxu0 %v854
      %864 = vmatprep.subr.bf16.mxu0 0
      %865 = vmatpush1.bf16.msra.mxu0 0
      %866 = vmatprep.subr.bf16.mxu0 0
      %867 = vmatpush1.bf16.msra.mxu0 0
      %868 = vmatprep.subr.bf16.mxu0 0
      %869 = vmatpush1.bf16.msra.mxu0 0
      %870 = vmatprep.subr.bf16.mxu0 0
      %871 = vmatpush1.bf16.msra.mxu0 0
      %872 = vmatprep.subr.bf16.mxu0 0
      %873 = vmatpush1.bf16.msra.mxu0 0
      %874 = vmatprep.subr.bf16.mxu0 0
      %875 = vmatpush1.bf16.msra.mxu0 0
      %876 = vmatprep.subr.bf16.mxu0 0
      %877 = vmatpush1.bf16.msra.mxu0 0
      %878 = vmatprep.subr.bf16.mxu0 0
      %879 = vmatpush1.bf16.msra.mxu0 0
      %880 = vmatprep.subr.bf16.mxu0 0
      %881 = vmatpush1.bf16.msra.mxu0 0
      %882 = vmatprep.subr.bf16.mxu0 0
      %883 = vmatpush1.bf16.msra.mxu0 0
      %884 = vmatprep.subr.bf16.mxu0 0
      %885 = vmatpush1.bf16.msra.mxu0 0
      %886 = vmatprep.subr.bf16.mxu0 0
      %887 = vmatpush1.bf16.msra.mxu0 0
      %888 = vmatprep.subr.bf16.mxu0 0
      %889 = vmatpush1.bf16.msra.mxu0 0
      %890 = vmatprep.subr.bf16.mxu0 0
      %891 = vmatpush1.bf16.msra.mxu0 0
      %892 = vmatprep.subr.bf16.mxu0 0
      %893 = vmatpush1.bf16.msra.mxu0 0
      %894 = vmatprep.mubr.bf16.mxu0 0
      %895 = vmatmul.mubr.bf16.gmra.mrb[0].mxu0 %v857
      %v896 = vpop.f32.mrb[0].mxu0
      %v897 = vadd.f32 0.0, %v896
      %v898 = vpop.f32.mrb[0].mxu0
      %v899 = vpop.f32.mrb[0].mxu0
      %v900 = vadd.f32 0.0, %v899
      %v901 = vpop.f32.mrb[0].mxu0
      %902 = vmatprep.mubr.bf16.mxu0 0
      %903 = vmatmul.mubr.bf16.gmra.mrb[0].mxu0 %v860
      %v904 = vpop.f32.mrb[0].mxu0
      %v905 = vadd.f32 0.0, %v904
      %v906 = vpop.f32.mrb[0].mxu0
      %v907 = vpop.f32.mrb[0].mxu0
      %v908 = vadd.f32 0.0, %v907
      %v909 = vpop.f32.mrb[0].mxu0
      %910 = vdwg.mxu0
      %v911 = vmul.f32 %v897, %v847
      %v912 = vmul.f32 %v900, %v848
      %v913 = vmul.f32 %v905, %v849
      %v914 = vmul.f32 %v908, %v850
      %v915 = vadd.f32 %v743, %v911
      %v916 = vadd.f32 %v744, %v912
      %v917 = vadd.f32 %v745, %v913
      %v918 = vadd.f32 %v746, %v914
      %919 = vrot.lane.b32.xlu0 %v400, 104
      %v920 = vpop.permute.xlu0 %919
      %921 = vrot.lane.b32.xlu0 %v401, 104
      %v922 = vpop.permute.xlu0 %921
      %923 = vrot.lane.b32.xlu0 %v408, 104
      %v924 = vpop.permute.xlu0 %923
      %v926 = vsel %vm409, %v920, 0
      %v929 = vsel %vm409, %v922, 0
      %v932 = vsel %vm409, %v924, 0
      %934 = vmatprep.subr.bf16.mxu0 0
      %935 = vmatpush1.bf16.xpose.msra.mxu0 %v932
      %936 = vmatprep.subr.bf16.mxu0 0
      %937 = vmatpush1.bf16.xpose.msra.mxu0 0
      %938 = vmatprep.subr.bf16.mxu0 0
      %939 = vmatpush1.bf16.xpose.msra.mxu0 0
      %940 = vmatprep.subr.bf16.mxu0 0
      %941 = vmatpush1.bf16.xpose.msra.mxu0 0
      %942 = vmatprep.subr.bf16.mxu0 0
      %943 = vmatpush1.bf16.xpose.msra.mxu0 0
      %944 = vmatprep.subr.bf16.mxu0 0
      %945 = vmatpush1.bf16.xpose.msra.mxu0 0
      %946 = vmatprep.subr.bf16.mxu0 0
      %947 = vmatpush1.bf16.xpose.msra.mxu0 0
      %948 = vmatprep.subr.bf16.mxu0 0
      %949 = vmatpush1.bf16.xpose.msra.mxu0 0
      %950 = vmatprep.subr.bf16.mxu0 0
      %951 = vmatpush1.bf16.xpose.msra.mxu0 0
      %952 = vmatprep.subr.bf16.mxu0 0
      %953 = vmatpush1.bf16.xpose.msra.mxu0 0
      %954 = vmatprep.subr.bf16.mxu0 0
      %955 = vmatpush1.bf16.xpose.msra.mxu0 0
      %956 = vmatprep.subr.bf16.mxu0 0
      %957 = vmatpush1.bf16.xpose.msra.mxu0 0
      %958 = vmatprep.subr.bf16.mxu0 0
      %959 = vmatpush1.bf16.xpose.msra.mxu0 0
      %960 = vmatprep.subr.bf16.mxu0 0
      %961 = vmatpush1.bf16.xpose.msra.mxu0 0
      %962 = vmatprep.subr.bf16.mxu0 0
      %963 = vmatpush1.bf16.xpose.msra.mxu0 0
      %964 = vmatprep.subr.bf16.mxu0 0
      %965 = vmatpush1.bf16.xpose.msra.mxu0 0
      %966 = vmatprep.mubr.bf16.mxu0 0
      %967 = vmatmul.mubr.bf16.gmra.mrb[0].mxu0 %v926
      %v968 = vpop.f32.mrb[0].mxu0
      %v969 = vadd.f32 0.0, %v968
      %v970 = vpop.f32.mrb[0].mxu0
      %v971 = vpop.f32.mrb[0].mxu0
      %v972 = vadd.f32 0.0, %v971
      %v973 = vpop.f32.mrb[0].mxu0
      %974 = vmatprep.mubr.bf16.mxu0 0
      %975 = vmatmul.mubr.bf16.gmra.mrb[0].mxu0 %v929
      %v976 = vpop.f32.mrb[0].mxu0
      %v977 = vadd.f32 0.0, %v976
      %v978 = vpop.f32.mrb[0].mxu0
      %v979 = vpop.f32.mrb[0].mxu0
      %v980 = vadd.f32 0.0, %v979
      %v981 = vpop.f32.mrb[0].mxu0
      %982 = vdwg.mxu0
      %v983 = vsel %vm468, %v969, -inf
      %984 = vmax.xlane.f32.xlu0 %v983
      %v985 = vpop.xlane.xlu0 %984
      %v986 = vsel %vm468, %v972, -inf
      %987 = vmax.xlane.f32.xlu0 %v986
      %v988 = vpop.xlane.xlu0 %987
      %v989 = vsel %vm468, %v977, -inf
      %990 = vmax.xlane.f32.xlu0 %v989
      %v991 = vpop.xlane.xlu0 %990
      %v992 = vsel %vm468, %v980, -inf
      %993 = vmax.xlane.f32.xlu0 %v992
      %v994 = vpop.xlane.xlu0 %993
      %v995 = vsub.f32 %v969, %v985
      %v996 = vsub.f32 %v972, %v988
      %v997 = vsub.f32 %v977, %v991
      %v998 = vsub.f32 %v980, %v994
      %v999 = vmul.f32 %v995, 1.442695
      %v1000 = vpow.pop %v999
      %v1001 = vmul.f32 %v996, 1.442695
      %v1002 = vpow.pop %v1001
      %v1003 = vmul.f32 %v997, 1.442695
      %v1004 = vpow.pop %v1003
      %v1005 = vmul.f32 %v998, 1.442695
      %v1006 = vpow.pop %v1005
      %v1007 = vsel %vm468, %v1000, 0.0
      %1008 = vadd.xlane.f32.xlu0 %v1007
      %v1009 = vpop.xlane.xlu0 %1008
      %v1010 = vsel %vm468, %v1002, 0.0
      %1011 = vadd.xlane.f32.xlu0 %v1010
      %v1012 = vpop.xlane.xlu0 %1011
      %v1013 = vsel %vm468, %v1004, 0.0
      %1014 = vadd.xlane.f32.xlu0 %v1013
      %v1015 = vpop.xlane.xlu0 %1014
      %v1016 = vsel %vm468, %v1006, 0.0
      %1017 = vadd.xlane.f32.xlu0 %v1016
      %v1018 = vpop.xlane.xlu0 %1017
      %v1019 = vrcp.pop %v1009
      %v1020 = vrcp.pop %v1012
      %v1021 = vrcp.pop %v1015
      %v1022 = vrcp.pop %v1018
      %v1023 = vpack.c.bf16 %v1002, %v1000
      %v1024 = vpack.c.bf16 %v1006, %v1004
      %v1025 = vunpack.c.h.b16 %v402
      %v1026 = vunpack.c.h.b16 %v403
      %v1027 = vpack.c.b16 %v1026, %v1025
      %v1030 = vsel %vm468, %v1023, 0
      %v1033 = vsel %vm468, %v1024, 0
      %1035 = vmatprep.subr.bf16.mxu0 0
      %1036 = vmatpush1.bf16.msra.mxu0 %v1027
      %1037 = vmatprep.subr.bf16.mxu0 0
      %1038 = vmatpush1.bf16.msra.mxu0 0
      %1039 = vmatprep.subr.bf16.mxu0 0
      %1040 = vmatpush1.bf16.msra.mxu0 0
      %1041 = vmatprep.subr.bf16.mxu0 0
      %1042 = vmatpush1.bf16.msra.mxu0 0
      %1043 = vmatprep.subr.bf16.mxu0 0
      %1044 = vmatpush1.bf16.msra.mxu0 0
      %1045 = vmatprep.subr.bf16.mxu0 0
      %1046 = vmatpush1.bf16.msra.mxu0 0
      %1047 = vmatprep.subr.bf16.mxu0 0
      %1048 = vmatpush1.bf16.msra.mxu0 0
      %1049 = vmatprep.subr.bf16.mxu0 0
      %1050 = vmatpush1.bf16.msra.mxu0 0
      %1051 = vmatprep.subr.bf16.mxu0 0
      %1052 = vmatpush1.bf16.msra.mxu0 0
      %1053 = vmatprep.subr.bf16.mxu0 0
      %1054 = vmatpush1.bf16.msra.mxu0 0
      %1055 = vmatprep.subr.bf16.mxu0 0
      %1056 = vmatpush1.bf16.msra.mxu0 0
      %1057 = vmatprep.subr.bf16.mxu0 0
      %1058 = vmatpush1.bf16.msra.mxu0 0
      %1059 = vmatprep.subr.bf16.mxu0 0
      %1060 = vmatpush1.bf16.msra.mxu0 0
      %1061 = vmatprep.subr.bf16.mxu0 0
      %1062 = vmatpush1.bf16.msra.mxu0 0
      %1063 = vmatprep.subr.bf16.mxu0 0
      %1064 = vmatpush1.bf16.msra.mxu0 0
      %1065 = vmatprep.subr.bf16.mxu0 0
      %1066 = vmatpush1.bf16.msra.mxu0 0
      %1067 = vmatprep.mubr.bf16.mxu0 0
      %1068 = vmatmul.mubr.bf16.gmra.mrb[0].mxu0 %v1030
      %v1069 = vpop.f32.mrb[0].mxu0
      %v1070 = vadd.f32 0.0, %v1069
      %v1071 = vpop.f32.mrb[0].mxu0
      %v1072 = vpop.f32.mrb[0].mxu0
      %v1073 = vadd.f32 0.0, %v1072
      %v1074 = vpop.f32.mrb[0].mxu0
      %1075 = vmatprep.mubr.bf16.mxu0 0
      %1076 = vmatmul.mubr.bf16.gmra.mrb[0].mxu0 %v1033
      %v1077 = vpop.f32.mrb[0].mxu0
      %v1078 = vadd.f32 0.0, %v1077
      %v1079 = vpop.f32.mrb[0].mxu0
      %v1080 = vpop.f32.mrb[0].mxu0
      %v1081 = vadd.f32 0.0, %v1080
      %v1082 = vpop.f32.mrb[0].mxu0
      %1083 = vdwg.mxu0
      %v1084 = vmul.f32 %v1070, %v1019
      %v1085 = vmul.f32 %v1073, %v1020
      %v1086 = vmul.f32 %v1078, %v1021
      %v1087 = vmul.f32 %v1081, %v1022
      %v1088 = vadd.f32 %v915, %v1084
      %v1089 = vadd.f32 %v916, %v1085
      %v1090 = vadd.f32 %v917, %v1086
      %v1091 = vadd.f32 %v918, %v1087
      %v1092 = vld [vmem:[%s4] sm:$0x1]
      %v1094 = vlaneseq
      %v1095 = vshrl.u32 %v1094, 7
      %v1096 = vsub.s32 0, %v1095
      %v1097 = vrot.slane %v1092, %v1096
      %v1099 = vadd.f32 %v1088, %v1097
      %v1100 = vadd.f32 %v1089, %v1097
      %v1101 = vadd.f32 %v1090, %v1097
      %v1102 = vadd.f32 %v1091, %v1097
      %1103 = vst.msk [vmem:[%s308] sm:$0xff] %vm340, %v1099
      %1104 = vst.msk [vmem:[%s308 + $0x8] sm:$0xff] %vm340, %v1100
      %1105 = vst.msk [vmem:[%s308 + $0x10] sm:$0xff] %vm340, %v1101
      %1106 = vst.msk [vmem:[%s308 + $0x18] sm:$0xff] %vm340, %v1102
      %s1107 = smul.u32 4, %s22
      %p1108 = scmp.lt.s32.totalorder %s21, 1
      %s1109 = scalar_select %p1108, %s21, 1
      %p1110 = scmp.lt.s32.totalorder %s1107, 7
      %s1111 = scalar_select %p1110, %s1107, 7
      %s1112 = smul.addr %s1109, 8
      %s1113 = sadd.s32 %s1111, %s1112
      %s1114 = smul.addr %s1113, 8
      %s1115 = scalar_lea.vmem %s5, %s1114
      // Predicated region
      $region41: #{multi_head_attention.3} parent=39 // pred_check
        %p1116 = pneg %p174
      $region42: #{multi_head_attention.3} parent=39 // pred_check_branch
        %1118 = sbr.rel (%p1116) target = $region44
      $region43: #{multi_head_attention.3} parent=39 // pred_region
        %s1119 = smul.u32 4, %s22
      $region44: #{multi_head_attention.3} parent=39 // pred_fallthru
        _
    $region40: #{multi_head_attention.3} parent=5 // pred_fallthru
      _
    %p1120 = scmp.le.s32.totalorder 2, %s11
    // Predicated region
    $region45: #{multi_head_attention.3} parent=5 // pred_check
      %p1121 = pneg %p1120
    $region46: #{multi_head_attention.3} parent=5 // pred_check_branch
      %1123 = sbr.rel (%p1121) target = $region48
    $region47: #{multi_head_attention.3} parent=5 // pred_region
      %s1124 = ssub.s32 %s11, 2
      // Predicated region
      $region49: #{multi_head_attention.3} parent=47 // pred_check
        %p1125 = pneg %p180
      $region50: #{multi_head_attention.3} parent=47 // pred_check_branch
        %1127 = sbr.rel (%p1125) target = $region52
      $region51: #{multi_head_attention.3} parent=47 // pred_region
        %s1128 = smul.u32 4, %s25
        %p1129 = scmp.lt.s32.totalorder %s24, 1
        %s1130 = scalar_select %p1129, %s24, 1
        %p1131 = scmp.lt.s32.totalorder %s1128, 7
        %s1132 = scalar_select %p1131, %s1128, 7
        %s1133 = smul.addr %s1130, 8
        %s1134 = sadd.s32 %s1132, %s1133
        %s1135 = smul.addr %s1134, 8
        %s1136 = scalar_lea.vmem %s5, %s1135
      $region52: #{multi_head_attention.3} parent=47 // pred_fallthru
        _
    $region48: #{multi_head_attention.3} parent=5 // pred_fallthru
      _
  $region6: #{multi_head_attention.3} parent=0 // loop_footer
    %s15 = sadd.s32 1, %s11
  $region7: #{multi_head_attention.3} parent=0 // loop_footer_branch
    %10 = sbr.rel target = $region3
  $region8: #{multi_head_attention.3} parent=0 // loop_exit
    _

</llo_original>
